<compile_context>
chip_gen: v7x
topology: tpu7x:2x2x1
jax: 0.10.0
libtpu: 0.0.40
codegen_flags: <defaults>
</compile_context>

<pallas_src>
import math

import numpy as np
import jax
import jax.numpy as jnp
from jax.experimental import pallas as pl
from jax.experimental.pallas import tpu as pltpu

_EPS = 1e-5


# --------------------------------------------------------------------------
# Constant matrices (built once in the wrapper)
# --------------------------------------------------------------------------

def _channel_proj(w_sp, c):
    """(W*C, W*C): (row of per-(w,c) sums) @ P = per-channel totals tiled over W."""
    return jnp.asarray(np.kron(np.ones((w_sp, w_sp), np.float32),
                               np.eye(c, dtype=np.float32)))


def _pool_selectors(w_sp, c):
    """Two (W*C, (W//2)*C) matrices selecting even / odd W positions."""
    wo = w_sp // 2
    even = np.kron(np.eye(wo, dtype=np.float32),
                   np.array([[1.0], [0.0]], np.float32))
    odd = np.kron(np.eye(wo, dtype=np.float32),
                  np.array([[0.0], [1.0]], np.float32))
    eye_c = np.eye(c, dtype=np.float32)
    return jnp.asarray(np.kron(even, eye_c)), jnp.asarray(np.kron(odd, eye_c))


def _lane_rep(w_sp, c):
    """(W*C, 2W*C): nearest-neighbour replication along W (lane dim)."""
    rep = np.kron(np.eye(w_sp, dtype=np.float32), np.ones((1, 2), np.float32))
    return jnp.asarray(np.kron(rep, np.eye(c, dtype=np.float32)))


def _row_rep(h_sp):
    """(2H, H): nearest-neighbour replication along H (row dim)."""
    return jnp.asarray(np.kron(np.eye(h_sp, dtype=np.float32),
                               np.ones((2, 1), np.float32)))


def _tile_ch(v, w_sp):
    """Per-channel vector -> (1, W*C) row tiled across W."""
    return jnp.tile(v.astype(jnp.float32), (w_sp,)).reshape(1, -1)


def _conv1x1_band(w_oihw, w_sp):
    """(W*Cin, W*Cout) block-diagonal matrix implementing a 1x1 conv."""
    cout, cin = w_oihw.shape[0], w_oihw.shape[1]
    wmat = w_oihw.reshape(cout, cin).T.astype(jnp.float32)
    return jnp.kron(jnp.eye(w_sp, dtype=jnp.float32), wmat)


def _conv3x3_bands(w_oihw, w_sp):
    """Three (W*Cin, W*Cout) band matrices (one per dy) for a 3x3 'same' conv.

    band_dy[wi*Cin+ci, wo*Cout+co] = w[co, ci, dy, wi-wo+1] when the tap is in
    range, else 0 -- this also encodes the zero padding along W, so only the
    H direction needs explicit padding inside the kernel.
    """
    cout, cin = w_oihw.shape[0], w_oihw.shape[1]
    wi = np.arange(w_sp)[:, None]
    wo = np.arange(w_sp)[None, :]
    dx = wi - wo + 1
    valid = jnp.asarray(((dx >= 0) & (dx <= 2)).astype(np.float32))
    dxc = jnp.asarray(np.clip(dx, 0, 2).astype(np.int32))
    bands = []
    for dy in range(3):
        wd = jnp.transpose(w_oihw[:, :, dy, :], (2, 1, 0)).astype(jnp.float32)
        g = wd[dxc] * valid[:, :, None, None]            # (W, W, Cin, Cout)
        bands.append(jnp.transpose(g, (0, 2, 1, 3)).reshape(w_sp * cin,
                                                            w_sp * cout))
    return bands


def _full_spec(arr):
    zeros = (0,) * arr.ndim
    return pl.BlockSpec(arr.shape, lambda i, _z=zeros: _z)


# --------------------------------------------------------------------------
# In-kernel helpers (operate on values / VMEM refs inside the mega-kernels)
# --------------------------------------------------------------------------

def _bn_scale_shift(v, proj, gamma_t, beta_t, count):
    """Training-mode BN scale/shift tiled over (W, C) lanes; two-pass variance."""
    inv = 1.0 / count
    mean = jnp.sum(jnp.dot(v, proj, preferred_element_type=jnp.float32),
                   axis=0, keepdims=True) * inv
    d = v - mean
    var = jnp.sum(jnp.dot(d * d, proj, preferred_element_type=jnp.float32),
                  axis=0, keepdims=True) * inv
    scale = gamma_t / jnp.sqrt(var + _EPS)
    shift = beta_t - mean * scale
    return scale, shift


def _fill_hpad(pad_ref, act, n_img, h_sp):
    """Zero the H-padded scratch and write each image's interior rows."""
    pad_ref[...] = jnp.zeros_like(pad_ref)
    for n in range(n_img):
        pad_ref[n * (h_sp + 2) + 1: n * (h_sp + 2) + 1 + h_sp, :] = (
            act[n * h_sp:(n + 1) * h_sp, :])


def _conv_rows(pad_ref, bands, n, h_sp):
    """3x3 conv for image n: three H-shifted row windows x band matrices."""
    base = n * (h_sp + 2)
    acc = jnp.dot(pad_ref[base:base + h_sp, :], bands[0],
                  preferred_element_type=jnp.float32)
    acc = acc + jnp.dot(pad_ref[base + 1:base + 1 + h_sp, :], bands[1],
                        preferred_element_type=jnp.float32)
    acc = acc + jnp.dot(pad_ref[base + 2:base + 2 + h_sp, :], bands[2],
                        preferred_element_type=jnp.float32)
    return acc


# --------------------------------------------------------------------------
# Branch: resample = None   (fused: BN1 stats+affine+ReLU, conv1, BN2, conv2,
#                            shortcut 1x1 / identity, residual add)
# --------------------------------------------------------------------------

def _forward_none(params, x_rows, n_img, h_sp, w_sp, cin, cout):
    identity_shortcut = (cin == cout)
    l_in, l_out = w_sp * cin, w_sp * cout
    rows = n_img * h_sp
    count = float(n_img * h_sp * w_sp)

    inputs = [
        x_rows,
        _channel_proj(w_sp, cin),
        _tile_ch(params["bn1_gamma"], w_sp), _tile_ch(params["bn1_beta"], w_sp),
        _tile_ch(params["bn2_gamma"], w_sp), _tile_ch(params["bn2_beta"], w_sp),
        *_conv3x3_bands(params["w1"], w_sp), _tile_ch(params["b1"], w_sp),
        *_conv3x3_bands(params["w2"], w_sp), _tile_ch(params["b2"], w_sp),
    ]
    if not identity_shortcut:
        inputs += [_conv1x1_band(params["ws"], w_sp),
                   _tile_ch(params["bs"], w_sp)]

    def kernel(*refs):
        it = iter(refs)
        x_ref, proj_ref = next(it), next(it)
        g1_ref, be1_ref = next(it), next(it)
        g2_ref, be2_ref = next(it), next(it)
        bands1 = (next(it), next(it), next(it))
        bias1_ref = next(it)
        bands2 = (next(it), next(it), next(it))
        bias2_ref = next(it)
        if identity_shortcut:
            blk_ref = bsc_ref = None
        else:
            blk_ref, bsc_ref = next(it), next(it)
        out_ref, pad_ref, h1_ref = next(it), next(it), next(it)

        x = x_ref[...]
        if identity_shortcut:
            shortcut = x
        else:
            shortcut = (jnp.dot(x, blk_ref[...],
                                preferred_element_type=jnp.float32)
                        + bsc_ref[...])

        s1, t1 = _bn_scale_shift(x, proj_ref[...], g1_ref[...], be1_ref[...],
                                 count)
        act1 = jnp.maximum(x * s1 + t1, 0.0)

        b1v = tuple(b[...] for b in bands1)
        _fill_hpad(pad_ref, act1, n_img, h_sp)
        for n in range(n_img):
            h1_ref[n * h_sp:(n + 1) * h_sp, :] = (
                _conv_rows(pad_ref, b1v, n, h_sp) + bias1_ref[...])
        h1 = h1_ref[...]

        s2, t2 = _bn_scale_shift(h1, proj_ref[...], g2_ref[...], be2_ref[...],
                                 count)
        act2 = jnp.maximum(h1 * s2 + t2, 0.0)

        b2v = tuple(b[...] for b in bands2)
        _fill_hpad(pad_ref, act2, n_img, h_sp)
        for n in range(n_img):
            out_ref[n * h_sp:(n + 1) * h_sp, :] = (
                _conv_rows(pad_ref, b2v, n, h_sp) + bias2_ref[...]
                + shortcut[n * h_sp:(n + 1) * h_sp, :])

    return pl.pallas_call(
        kernel,
        out_shape=jax.ShapeDtypeStruct((rows, l_out), jnp.float32),
        grid=(1,),
        in_specs=[_full_spec(a) for a in inputs],
        out_specs=pl.BlockSpec((rows, l_out), lambda i: (0, 0)),
        scratch_shapes=[pltpu.VMEM((n_img * (h_sp + 2), l_in), jnp.float32),
                        pltpu.VMEM((rows, l_in), jnp.float32)],
        compiler_params=pltpu.CompilerParams(
            dimension_semantics=("arbitrary",)),
    )(*inputs)


# --------------------------------------------------------------------------
# Branch: resample = 'down' (adds fused MaxPool2x2 + pooled 1x1 shortcut)
# --------------------------------------------------------------------------

def _forward_down(params, x_rows, n_img, h_sp, w_sp, cin, cout):
    ho_sp, wo_sp = h_sp // 2, w_sp // 2
    l_in = w_sp * cin
    lo_in, lo_out = wo_sp * cin, wo_sp * cout
    rows = n_img * h_sp
    rows_o = n_img * ho_sp
    count = float(n_img * h_sp * w_sp)

    even_in, odd_in = _pool_selectors(w_sp, cin)
    even_out, odd_out = _pool_selectors(w_sp, cout)

    inputs = [
        x_rows,
        _channel_proj(w_sp, cin),
        _tile_ch(params["bn1_gamma"], w_sp), _tile_ch(params["bn1_beta"], w_sp),
        _tile_ch(params["bn2_gamma"], w_sp), _tile_ch(params["bn2_beta"], w_sp),
        *_conv3x3_bands(params["w1"], w_sp), _tile_ch(params["b1"], w_sp),
        *_conv3x3_bands(params["w2"], w_sp), _tile_ch(params["b2"], w_sp),
        even_in, odd_in, even_out, odd_out,
        _conv1x1_band(params["ws"], wo_sp), _tile_ch(params["bs"], wo_sp),
    ]

    def kernel(*refs):
        it = iter(refs)
        x_ref, proj_ref = next(it), next(it)
        g1_ref, be1_ref = next(it), next(it)
        g2_ref, be2_ref = next(it), next(it)
        bands1 = (next(it), next(it), next(it))
        bias1_ref = next(it)
        bands2 = (next(it), next(it), next(it))
        bias2_ref = next(it)
        ei_ref, oi_ref, eo_ref, oo_ref = next(it), next(it), next(it), next(it)
        blk_ref, bsc_ref = next(it), next(it)
        out_ref, pad_ref, h1_ref, px_ref = (next(it), next(it), next(it),
                                            next(it))

        x = x_ref[...]

        # shortcut = Conv1x1(MaxPool2x2(x)); W pairs via selection matmuls,
        # H pairs as unrolled row maxes.
        xlp = jnp.maximum(
            jnp.dot(x, ei_ref[...], preferred_element_type=jnp.float32),
            jnp.dot(x, oi_ref[...], preferred_element_type=jnp.float32))
        for n in range(n_img):
            for hh in range(ho_sp):
                r = n * h_sp + 2 * hh
                px_ref[n * ho_sp + hh: n * ho_sp + hh + 1, :] = jnp.maximum(
                    xlp[r:r + 1, :], xlp[r + 1:r + 2, :])
        shortcut = (jnp.dot(px_ref[...], blk_ref[...],
                            preferred_element_type=jnp.float32) + bsc_ref[...])

        s1, t1 = _bn_scale_shift(x, proj_ref[...], g1_ref[...], be1_ref[...],
                                 count)
        act1 = jnp.maximum(x * s1 + t1, 0.0)

        b1v = tuple(b[...] for b in bands1)
        _fill_hpad(pad_ref, act1, n_img, h_sp)
        for n in range(n_img):
            h1_ref[n * h_sp:(n + 1) * h_sp, :] = (
                _conv_rows(pad_ref, b1v, n, h_sp) + bias1_ref[...])
        h1 = h1_ref[...]

        s2, t2 = _bn_scale_shift(h1, proj_ref[...], g2_ref[...], be2_ref[...],
                                 count)
        act2 = jnp.maximum(h1 * s2 + t2, 0.0)

        b2v = tuple(b[...] for b in bands2)
        _fill_hpad(pad_ref, act2, n_img, h_sp)
        for n in range(n_img):
            h2 = _conv_rows(pad_ref, b2v, n, h_sp) + bias2_ref[...]
            hlp = jnp.maximum(
                jnp.dot(h2, eo_ref[...], preferred_element_type=jnp.float32),
                jnp.dot(h2, oo_ref[...], preferred_element_type=jnp.float32))
            for hh in range(ho_sp):
                out_ref[n * ho_sp + hh: n * ho_sp + hh + 1, :] = (
                    shortcut[n * ho_sp + hh: n * ho_sp + hh + 1, :]
                    + jnp.maximum(hlp[2 * hh:2 * hh + 1, :],
                                  hlp[2 * hh + 1:2 * hh + 2, :]))

    return pl.pallas_call(
        kernel,
        out_shape=jax.ShapeDtypeStruct((rows_o, lo_out), jnp.float32),
        grid=(1,),
        in_specs=[_full_spec(a) for a in inputs],
        out_specs=pl.BlockSpec((rows_o, lo_out), lambda i: (0, 0)),
        scratch_shapes=[pltpu.VMEM((n_img * (h_sp + 2), l_in), jnp.float32),
                        pltpu.VMEM((rows, l_in), jnp.float32),
                        pltpu.VMEM((rows_o, lo_in), jnp.float32)],
        compiler_params=pltpu.CompilerParams(
            dimension_semantics=("arbitrary",)),
    )(*inputs)


# --------------------------------------------------------------------------
# Branch: resample = 'up' (nearest 2x upsample fused via replication matmuls)
# --------------------------------------------------------------------------

def _forward_up(params, x_rows, n_img, h_sp, w_sp, cin, cout):
    h2_sp, w2_sp = 2 * h_sp, 2 * w_sp
    l2_in, l2_out = w2_sp * cin, w2_sp * cout
    rows_hi = n_img * h2_sp
    count1 = float(n_img * h_sp * w_sp)
    count2 = float(n_img * h2_sp * w2_sp)

    inputs = [
        x_rows,
        _channel_proj(w_sp, cin), _channel_proj(w2_sp, cout),
        _tile_ch(params["bn1_gamma"], w_sp), _tile_ch(params["bn1_beta"], w_sp),
        _tile_ch(params["bn2_gamma"], w2_sp), _tile_ch(params["bn2_beta"], w2_sp),
        *_conv3x3_bands(params["w2"], w2_sp), _tile_ch(params["b2"], w2_sp),
        *_conv3x3_bands(params["w3"], w2_sp), _tile_ch(params["b3"], w2_sp),
        _conv1x1_band(params["ws"], w_sp), _tile_ch(params["bs"], w_sp),
        _lane_rep(w_sp, cin), _lane_rep(w_sp, cout), _row_rep(h_sp),
    ]

    def kernel(*refs):
        it = iter(refs)
        x_ref = next(it)
        p1_ref, p2_ref = next(it), next(it)
        g1_ref, be1_ref = next(it), next(it)
        g2_ref, be2_ref = next(it), next(it)
        bands2 = (next(it), next(it), next(it))
        bias2_ref = next(it)
        bands3 = (next(it), next(it), next(it))
        bias3_ref = next(it)
        blk_ref, bsc_ref = next(it), next(it)
        lri_ref, lro_ref, rr_ref = next(it), next(it), next(it)
        out_ref, pad2_ref, pad3_ref, h2_ref = (next(it), next(it), next(it),
                                               next(it))

        x = x_ref[...]
        rr = rr_ref[...]                                        # (2H, H)

        # Shortcut: 1x1 conv at LOW resolution (commutes with nearest
        # upsample); replication happens only when adding to the output.
        sc_lo = (jnp.dot(x, blk_ref[...], preferred_element_type=jnp.float32)
                 + bsc_ref[...])                                # (N*H, W*Cout)
        sc_lane = jnp.dot(sc_lo, lro_ref[...],
                          preferred_element_type=jnp.float32)   # (N*H, 2W*Cout)

        s1, t1 = _bn_scale_shift(x, p1_ref[...], g1_ref[...], be1_ref[...],
                                 count1)
        act1 = jnp.maximum(x * s1 + t1, 0.0)                    # (N*H, W*Cin)
        act1w = jnp.dot(act1, lri_ref[...],
                        preferred_element_type=jnp.float32)     # (N*H, 2W*Cin)

        # conv_2 on the (virtually) upsampled activation.
        b2v = tuple(b[...] for b in bands2)
        pad2_ref[...] = jnp.zeros_like(pad2_ref)
        for n in range(n_img):
            up_img = jnp.dot(rr, act1w[n * h_sp:(n + 1) * h_sp, :],
                             preferred_element_type=jnp.float32)  # (2H, 2W*Cin)
            pad2_ref[n * (h2_sp + 2) + 1: n * (h2_sp + 2) + 1 + h2_sp, :] = up_img
        for n in range(n_img):
            h2_ref[n * h2_sp:(n + 1) * h2_sp, :] = (
                _conv_rows(pad2_ref, b2v, n, h2_sp) + bias2_ref[...])
        h2 = h2_ref[...]

        s2, t2 = _bn_scale_shift(h2, p2_ref[...], g2_ref[...], be2_ref[...],
                                 count2)
        act2 = jnp.maximum(h2 * s2 + t2, 0.0)

        b3v = tuple(b[...] for b in bands3)
        _fill_hpad(pad3_ref, act2, n_img, h2_sp)
        for n in range(n_img):
            h3 = _conv_rows(pad3_ref, b3v, n, h2_sp) + bias3_ref[...]
            sc_img = jnp.dot(rr, sc_lane[n * h_sp:(n + 1) * h_sp, :],
                             preferred_element_type=jnp.float32)
            out_ref[n * h2_sp:(n + 1) * h2_sp, :] = h3 + sc_img

    return pl.pallas_call(
        kernel,
        out_shape=jax.ShapeDtypeStruct((rows_hi, l2_out), jnp.float32),
        grid=(1,),
        in_specs=[_full_spec(a) for a in inputs],
        out_specs=pl.BlockSpec((rows_hi, l2_out), lambda i: (0, 0)),
        scratch_shapes=[pltpu.VMEM((n_img * (h2_sp + 2), l2_in), jnp.float32),
                        pltpu.VMEM((n_img * (h2_sp + 2), l2_out), jnp.float32),
                        pltpu.VMEM((rows_hi, l2_out), jnp.float32)],
        compiler_params=pltpu.CompilerParams(
            dimension_semantics=("arbitrary",)),
    )(*inputs)


# --------------------------------------------------------------------------
# Parameters
# --------------------------------------------------------------------------

def init_params(key, input_dim, output_dim, resample):
    def conv_init(k, cout, cin, ksz):
        kw, kb = jax.random.split(k)
        bound = 1.0 / math.sqrt(cin * ksz * ksz)
        w = jax.random.uniform(kw, (cout, cin, ksz, ksz), jnp.float32,
                               -bound, bound)
        b = jax.random.uniform(kb, (cout,), jnp.float32, -bound, bound)
        return w, b

    keys = jax.random.split(key, 3)
    p = {"bn1_gamma": jnp.ones((input_dim,), jnp.float32),
         "bn1_beta": jnp.zeros((input_dim,), jnp.float32)}
    bn2_dim = output_dim if resample == "up" else input_dim
    p["bn2_gamma"] = jnp.ones((bn2_dim,), jnp.float32)
    p["bn2_beta"] = jnp.zeros((bn2_dim,), jnp.float32)

    p["ws"], p["bs"] = conv_init(keys[0], output_dim, input_dim, 1)
    if resample == "up":
        p["w2"], p["b2"] = conv_init(keys[1], output_dim, input_dim, 3)
        p["w3"], p["b3"] = conv_init(keys[2], output_dim, output_dim, 3)
    else:
        p["w1"], p["b1"] = conv_init(keys[1], input_dim, input_dim, 3)
        p["w2"], p["b2"] = conv_init(keys[2], output_dim, input_dim, 3)
    return p


# --------------------------------------------------------------------------
# Forward (Pallas)
# --------------------------------------------------------------------------

def residual_block_forward(params, x_nchw, input_dim, output_dim,
                           resample=None):
    x_nhwc = jnp.transpose(x_nchw, (0, 2, 3, 1)).astype(jnp.float32)
    n_img, h_sp, w_sp, cin = x_nhwc.shape
    cout = output_dim
    x_rows = x_nhwc.reshape(n_img * h_sp, w_sp * cin)

    if resample is None:
        out_rows = _forward_none(params, x_rows, n_img, h_sp, w_sp, cin, cout)
        h_out, w_out = h_sp, w_sp
    elif resample == "down":
        out_rows = _forward_down(params, x_rows, n_img, h_sp, w_sp, cin, cout)
        h_out, w_out = h_sp // 2, w_sp // 2
    elif resample == "up":
        out_rows = _forward_up(params, x_rows, n_img, h_sp, w_sp, cin, cout)
        h_out, w_out = 2 * h_sp, 2 * w_sp
    else:
        raise ValueError(f"unknown resample: {resample}")

    out = out_rows.reshape(n_img, h_out, w_out, cout)
    return jnp.transpose(out, (0, 3, 1, 2))  # NHWC -> NCHW


# --------------------------------------------------------------------------
# Pure-JAX reference
# --------------------------------------------------------------------------

def reference_forward(params, x, input_dim, output_dim, resample=None):
    def bn_relu(t, g, b):
        mean = jnp.mean(t, axis=(0, 2, 3), keepdims=True)
        var = jnp.var(t, axis=(0, 2, 3), keepdims=True)
        y = (t - mean) / jnp.sqrt(var + 1e-5)
        y = y * g.reshape(1, -1, 1, 1) + b.reshape(1, -1, 1, 1)
        return jax.nn.relu(y)

    def conv(t, w, b, pad):
        out = jax.lax.conv_general_dilated(
            t, w, (1, 1), ((pad, pad), (pad, pad)),
            dimension_numbers=("NCHW", "OIHW", "NCHW"),
            precision=jax.lax.Precision.HIGHEST)
        return out + b.reshape(1, -1, 1, 1)

    def maxpool(t):
        return jax.lax.reduce_window(t, -jnp.inf, jax.lax.max,
                                     (1, 1, 2, 2), (1, 1, 2, 2), "VALID")

    def up(t):
        return jnp.repeat(jnp.repeat(t, 2, axis=2), 2, axis=3)

    if resample is None and output_dim == input_dim:
        h = bn_relu(x, params["bn1_gamma"], params["bn1_beta"])
        h = conv(h, params["w1"], params["b1"], 1)
        h = bn_relu(h, params["bn2_gamma"], params["bn2_beta"])
        h = conv(h, params["w2"], params["b2"], 1)
        return x + h
    elif resample is None:
        sc = conv(x, params["ws"], params["bs"], 0)
        h = bn_relu(x, params["bn1_gamma"], params["bn1_beta"])
        h = conv(h, params["w1"], params["b1"], 1)
        h = bn_relu(h, params["bn2_gamma"], params["bn2_beta"])
        h = conv(h, params["w2"], params["b2"], 1)
        return sc + h
    elif resample == "down":
        sc = conv(maxpool(x), params["ws"], params["bs"], 0)
        h = bn_relu(x, params["bn1_gamma"], params["bn1_beta"])
        h = conv(h, params["w1"], params["b1"], 1)
        h = bn_relu(h, params["bn2_gamma"], params["bn2_beta"])
        h = conv(h, params["w2"], params["b2"], 1)
        return sc + maxpool(h)
    else:
        sc = conv(up(x), params["ws"], params["bs"], 0)
        h = bn_relu(x, params["bn1_gamma"], params["bn1_beta"])
        h = up(h)
        h = conv(h, params["w2"], params["b2"], 1)
        h = bn_relu(h, params["bn2_gamma"], params["bn2_beta"])
        h = conv(h, params["w3"], params["b3"], 1)
        return sc + h


# --------------------------------------------------------------------------
# Main
# --------------------------------------------------------------------------

if __name__ == "__main__":
    key = jax.random.PRNGKey(0)
    N, Cin, Cout, H, W = 2, 4, 8, 16, 16
    configs = [(None, Cin, Cin), (None, Cin, Cout),
               ("down", Cin, Cout), ("up", Cin, Cout)]

    kx, kp = jax.random.split(key)
    ok = True
    for resample, ind, outd in configs:
        kx, k1 = jax.random.split(kx)
        kp, k2 = jax.random.split(kp)
        x = jax.random.normal(k1, (N, ind, H, W), jnp.float32)
        params = init_params(k2, ind, outd, resample)

        out = residual_block_forward(params, x, ind, outd, resample)
        out = jax.block_until_ready(out)

        ref = reference_forward(params, x, ind, outd, resample)
        if not jnp.allclose(out, ref, atol=1e-2, rtol=1e-2):
            ok = False
            print(f"mismatch for resample={resample}: max abs diff = "
                  f"{float(jnp.max(jnp.abs(out - ref)))}")

    if ok:
        print("KERNEL_OK")
</pallas_src>

<mosaic_0001>
module attributes {stable_mosaic.version = 11 : i64} {
  func.func @kernel(%arg0: i32, %arg1: memref<32x64xf32, #tpu.memory_space<vmem>>, %arg2: memref<64x64xf32, #tpu.memory_space<vmem>>, %arg3: memref<1x64xf32, #tpu.memory_space<vmem>>, %arg4: memref<1x64xf32, #tpu.memory_space<vmem>>, %arg5: memref<1x64xf32, #tpu.memory_space<vmem>>, %arg6: memref<1x64xf32, #tpu.memory_space<vmem>>, %arg7: memref<64x64xf32, #tpu.memory_space<vmem>>, %arg8: memref<64x64xf32, #tpu.memory_space<vmem>>, %arg9: memref<64x64xf32, #tpu.memory_space<vmem>>, %arg10: memref<1x64xf32, #tpu.memory_space<vmem>>, %arg11: memref<64x64xf32, #tpu.memory_space<vmem>>, %arg12: memref<64x64xf32, #tpu.memory_space<vmem>>, %arg13: memref<64x64xf32, #tpu.memory_space<vmem>>, %arg14: memref<1x64xf32, #tpu.memory_space<vmem>>, %arg15: memref<32x64xf32, #tpu.memory_space<vmem>>, %arg16: memref<36x64xf32, #tpu.memory_space<vmem>>, %arg17: memref<32x64xf32, #tpu.memory_space<vmem>>) attributes {dimension_semantics = [#tpu.dimension_semantics<arbitrary>], iteration_bounds = array<i64: 1>, scalar_prefetch = 0 : i64, scratch_operands = 2 : i64, tpu.core_type = #tpu.core_type<tc>, window_params = [{pipeline_mode = #tpu.pipeline_mode<synchronous>, transform_indices = @transform_0, window_bounds = array<i64: 32, 64>}, {pipeline_mode = #tpu.pipeline_mode<synchronous>, transform_indices = @transform_1, window_bounds = array<i64: 64, 64>}, {pipeline_mode = #tpu.pipeline_mode<synchronous>, transform_indices = @transform_2, window_bounds = array<i64: 1, 64>}, {pipeline_mode = #tpu.pipeline_mode<synchronous>, transform_indices = @transform_3, window_bounds = array<i64: 1, 64>}, {pipeline_mode = #tpu.pipeline_mode<synchronous>, transform_indices = @transform_4, window_bounds = array<i64: 1, 64>}, {pipeline_mode = #tpu.pipeline_mode<synchronous>, transform_indices = @transform_5, window_bounds = array<i64: 1, 64>}, {pipeline_mode = #tpu.pipeline_mode<synchronous>, transform_indices = @transform_6, window_bounds = array<i64: 64, 64>}, {pipeline_mode = #tpu.pipeline_mode<synchronous>, transform_indices = @transform_7, window_bounds = array<i64: 64, 64>}, {pipeline_mode = #tpu.pipeline_mode<synchronous>, transform_indices = @transform_8, window_bounds = array<i64: 64, 64>}, {pipeline_mode = #tpu.pipeline_mode<synchronous>, transform_indices = @transform_9, window_bounds = array<i64: 1, 64>}, {pipeline_mode = #tpu.pipeline_mode<synchronous>, transform_indices = @transform_10, window_bounds = array<i64: 64, 64>}, {pipeline_mode = #tpu.pipeline_mode<synchronous>, transform_indices = @transform_11, window_bounds = array<i64: 64, 64>}, {pipeline_mode = #tpu.pipeline_mode<synchronous>, transform_indices = @transform_12, window_bounds = array<i64: 64, 64>}, {pipeline_mode = #tpu.pipeline_mode<synchronous>, transform_indices = @transform_13, window_bounds = array<i64: 1, 64>}, {pipeline_mode = #tpu.pipeline_mode<synchronous>, transform_indices = @transform_14, window_bounds = array<i64: 32, 64>}]} {
    %c0 = arith.constant 0 : index
    %c0_0 = arith.constant 0 : index
    %0 = vector.load %arg1[%c0, %c0_0] : memref<32x64xf32, #tpu.memory_space<vmem>>, vector<32x64xf32>
    %c0_1 = arith.constant 0 : index
    %c0_2 = arith.constant 0 : index
    %1 = vector.load %arg2[%c0_1, %c0_2] : memref<64x64xf32, #tpu.memory_space<vmem>>, vector<64x64xf32>
    %c0_3 = arith.constant 0 : index
    %c0_4 = arith.constant 0 : index
    %2 = vector.load %arg3[%c0_3, %c0_4] : memref<1x64xf32, #tpu.memory_space<vmem>>, vector<1x64xf32>
    %c0_5 = arith.constant 0 : index
    %c0_6 = arith.constant 0 : index
    %3 = vector.load %arg4[%c0_5, %c0_6] : memref<1x64xf32, #tpu.memory_space<vmem>>, vector<1x64xf32>
    %cst = arith.constant dense<0.000000e+00> : vector<32x64xf32>
    %4 = tpu.matmul %0, %1, %cst {dimension_numbers = #tpu.dot_dimension_numbers<[1], [0], [0], [1], [0, 0, 1, 1], [], []>} : vector<32x64xf32>, vector<64x64xf32>, vector<32x64xf32> -> vector<32x64xf32>
    %cst_7 = arith.constant dense<0.000000e+00> : vector<64xf32>
    %5 = vector.multi_reduction <add>, %4, %cst_7 [0] : vector<32x64xf32> to vector<64xf32>
    %6 = vector.shape_cast %5 : vector<64xf32> to vector<1x64xf32>
    %cst_8 = arith.constant 0.001953125 : f32
    %7 = vector.broadcast %cst_8 : f32 to vector<1x64xf32>
    %8 = arith.mulf %6, %7 : vector<1x64xf32>
    %9 = vector.broadcast %8 : vector<1x64xf32> to vector<32x64xf32>
    %10 = arith.subf %0, %9 : vector<32x64xf32>
    %11 = arith.mulf %10, %10 : vector<32x64xf32>
    %cst_9 = arith.constant dense<0.000000e+00> : vector<32x64xf32>
    %12 = tpu.matmul %11, %1, %cst_9 {dimension_numbers = #tpu.dot_dimension_numbers<[1], [0], [0], [1], [0, 0, 1, 1], [], []>} : vector<32x64xf32>, vector<64x64xf32>, vector<32x64xf32> -> vector<32x64xf32>
    %cst_10 = arith.constant dense<0.000000e+00> : vector<64xf32>
    %13 = vector.multi_reduction <add>, %12, %cst_10 [0] : vector<32x64xf32> to vector<64xf32>
    %14 = vector.shape_cast %13 : vector<64xf32> to vector<1x64xf32>
    %cst_11 = arith.constant 0.001953125 : f32
    %15 = vector.broadcast %cst_11 : f32 to vector<1x64xf32>
    %16 = arith.mulf %14, %15 : vector<1x64xf32>
    %cst_12 = arith.constant 9.99999974E-6 : f32
    %17 = vector.broadcast %cst_12 : f32 to vector<1x64xf32>
    %18 = arith.addf %16, %17 : vector<1x64xf32>
    %19 = math.sqrt %18 : vector<1x64xf32>
    %20 = arith.divf %2, %19 : vector<1x64xf32>
    %21 = arith.mulf %8, %20 : vector<1x64xf32>
    %22 = arith.subf %3, %21 : vector<1x64xf32>
    %23 = vector.broadcast %20 : vector<1x64xf32> to vector<32x64xf32>
    %24 = arith.mulf %0, %23 : vector<32x64xf32>
    %25 = vector.broadcast %22 : vector<1x64xf32> to vector<32x64xf32>
    %26 = arith.addf %24, %25 : vector<32x64xf32>
    %cst_13 = arith.constant 0.000000e+00 : f32
    %27 = vector.broadcast %cst_13 : f32 to vector<32x64xf32>
    %28 = arith.maximumf %26, %27 : vector<32x64xf32>
    %c0_14 = arith.constant 0 : index
    %c0_15 = arith.constant 0 : index
    %29 = vector.load %arg7[%c0_14, %c0_15] : memref<64x64xf32, #tpu.memory_space<vmem>>, vector<64x64xf32>
    %c0_16 = arith.constant 0 : index
    %c0_17 = arith.constant 0 : index
    %30 = vector.load %arg8[%c0_16, %c0_17] : memref<64x64xf32, #tpu.memory_space<vmem>>, vector<64x64xf32>
    %c0_18 = arith.constant 0 : index
    %c0_19 = arith.constant 0 : index
    %31 = vector.load %arg9[%c0_18, %c0_19] : memref<64x64xf32, #tpu.memory_space<vmem>>, vector<64x64xf32>
    %cst_20 = arith.constant 0.000000e+00 : f32
    %32 = vector.broadcast %cst_20 : f32 to vector<36x64xf32>
    %c0_21 = arith.constant 0 : index
    %c0_22 = arith.constant 0 : index
    %33 = vector.load %arg16[%c0_21, %c0_22] : memref<36x64xf32, #tpu.memory_space<vmem>>, vector<36x64xf32>
    tpu.vector_store %arg16[%c0_21, %c0_22], %32 {strides = array<i32>} : memref<36x64xf32, #tpu.memory_space<vmem>>, vector<36x64xf32>,
    %34 = vector.extract_strided_slice %28 {offsets = [0, 0], sizes = [16, 64], strides = [1, 1]} : vector<32x64xf32> to vector<16x64xf32>
    %c1 = arith.constant 1 : index
    %c0_23 = arith.constant 0 : index
    %35 = vector.load %arg16[%c1, %c0_23] : memref<36x64xf32, #tpu.memory_space<vmem>>, vector<16x64xf32>
    tpu.vector_store %arg16[%c1, %c0_23], %34 {strides = array<i32>} : memref<36x64xf32, #tpu.memory_space<vmem>>, vector<16x64xf32>,
    %36 = vector.extract_strided_slice %28 {offsets = [16, 0], sizes = [16, 64], strides = [1, 1]} : vector<32x64xf32> to vector<16x64xf32>
    %c19 = arith.constant 19 : index
    %c0_24 = arith.constant 0 : index
    %37 = vector.load %arg16[%c19, %c0_24] : memref<36x64xf32, #tpu.memory_space<vmem>>, vector<16x64xf32>
    tpu.vector_store %arg16[%c19, %c0_24], %36 {strides = array<i32>} : memref<36x64xf32, #tpu.memory_space<vmem>>, vector<16x64xf32>,
    %c0_25 = arith.constant 0 : index
    %c0_26 = arith.constant 0 : index
    %38 = vector.load %arg16[%c0_25, %c0_26] : memref<36x64xf32, #tpu.memory_space<vmem>>, vector<16x64xf32>
    %cst_27 = arith.constant dense<0.000000e+00> : vector<16x64xf32>
    %39 = tpu.matmul %38, %29, %cst_27 {dimension_numbers = #tpu.dot_dimension_numbers<[1], [0], [0], [1], [0, 0, 1, 1], [], []>} : vector<16x64xf32>, vector<64x64xf32>, vector<16x64xf32> -> vector<16x64xf32>
    %c1_28 = arith.constant 1 : index
    %c0_29 = arith.constant 0 : index
    %40 = vector.load %arg16[%c1_28, %c0_29] : memref<36x64xf32, #tpu.memory_space<vmem>>, vector<16x64xf32>
    %cst_30 = arith.constant dense<0.000000e+00> : vector<16x64xf32>
    %41 = tpu.matmul %40, %30, %cst_30 {dimension_numbers = #tpu.dot_dimension_numbers<[1], [0], [0], [1], [0, 0, 1, 1], [], []>} : vector<16x64xf32>, vector<64x64xf32>, vector<16x64xf32> -> vector<16x64xf32>
    %42 = arith.addf %39, %41 : vector<16x64xf32>
    %c2 = arith.constant 2 : index
    %c0_31 = arith.constant 0 : index
    %43 = vector.load %arg16[%c2, %c0_31] : memref<36x64xf32, #tpu.memory_space<vmem>>, vector<16x64xf32>
    %cst_32 = arith.constant dense<0.000000e+00> : vector<16x64xf32>
    %44 = tpu.matmul %43, %31, %cst_32 {dimension_numbers = #tpu.dot_dimension_numbers<[1], [0], [0], [1], [0, 0, 1, 1], [], []>} : vector<16x64xf32>, vector<64x64xf32>, vector<16x64xf32> -> vector<16x64xf32>
    %45 = arith.addf %42, %44 : vector<16x64xf32>
    %c0_33 = arith.constant 0 : index
    %c0_34 = arith.constant 0 : index
    %46 = vector.load %arg10[%c0_33, %c0_34] : memref<1x64xf32, #tpu.memory_space<vmem>>, vector<1x64xf32>
    %47 = vector.broadcast %46 : vector<1x64xf32> to vector<16x64xf32>
    %48 = arith.addf %45, %47 : vector<16x64xf32>
    %c0_35 = arith.constant 0 : index
    %c0_36 = arith.constant 0 : index
    %49 = vector.load %arg17[%c0_35, %c0_36] : memref<32x64xf32, #tpu.memory_space<vmem>>, vector<16x64xf32>
    tpu.vector_store %arg17[%c0_35, %c0_36], %48 {strides = array<i32>} : memref<32x64xf32, #tpu.memory_space<vmem>>, vector<16x64xf32>,
    %c18 = arith.constant 18 : index
    %c0_37 = arith.constant 0 : index
    %50 = vector.load %arg16[%c18, %c0_37] : memref<36x64xf32, #tpu.memory_space<vmem>>, vector<16x64xf32>
    %cst_38 = arith.constant dense<0.000000e+00> : vector<16x64xf32>
    %51 = tpu.matmul %50, %29, %cst_38 {dimension_numbers = #tpu.dot_dimension_numbers<[1], [0], [0], [1], [0, 0, 1, 1], [], []>} : vector<16x64xf32>, vector<64x64xf32>, vector<16x64xf32> -> vector<16x64xf32>
    %c19_39 = arith.constant 19 : index
    %c0_40 = arith.constant 0 : index
    %52 = vector.load %arg16[%c19_39, %c0_40] : memref<36x64xf32, #tpu.memory_space<vmem>>, vector<16x64xf32>
    %cst_41 = arith.constant dense<0.000000e+00> : vector<16x64xf32>
    %53 = tpu.matmul %52, %30, %cst_41 {dimension_numbers = #tpu.dot_dimension_numbers<[1], [0], [0], [1], [0, 0, 1, 1], [], []>} : vector<16x64xf32>, vector<64x64xf32>, vector<16x64xf32> -> vector<16x64xf32>
    %54 = arith.addf %51, %53 : vector<16x64xf32>
    %c20 = arith.constant 20 : index
    %c0_42 = arith.constant 0 : index
    %55 = vector.load %arg16[%c20, %c0_42] : memref<36x64xf32, #tpu.memory_space<vmem>>, vector<16x64xf32>
    %cst_43 = arith.constant dense<0.000000e+00> : vector<16x64xf32>
    %56 = tpu.matmul %55, %31, %cst_43 {dimension_numbers = #tpu.dot_dimension_numbers<[1], [0], [0], [1], [0, 0, 1, 1], [], []>} : vector<16x64xf32>, vector<64x64xf32>, vector<16x64xf32> -> vector<16x64xf32>
    %57 = arith.addf %54, %56 : vector<16x64xf32>
    %c0_44 = arith.constant 0 : index
    %c0_45 = arith.constant 0 : index
    %58 = vector.load %arg10[%c0_44, %c0_45] : memref<1x64xf32, #tpu.memory_space<vmem>>, vector<1x64xf32>
    %59 = vector.broadcast %58 : vector<1x64xf32> to vector<16x64xf32>
    %60 = arith.addf %57, %59 : vector<16x64xf32>
    %c16 = arith.constant 16 : index
    %c0_46 = arith.constant 0 : index
    %61 = vector.load %arg17[%c16, %c0_46] : memref<32x64xf32, #tpu.memory_space<vmem>>, vector<16x64xf32>
    tpu.vector_store %arg17[%c16, %c0_46], %60 {strides = array<i32>} : memref<32x64xf32, #tpu.memory_space<vmem>>, vector<16x64xf32>,
    %c0_47 = arith.constant 0 : index
    %c0_48 = arith.constant 0 : index
    %62 = vector.load %arg17[%c0_47, %c0_48] : memref<32x64xf32, #tpu.memory_space<vmem>>, vector<32x64xf32>
    %c0_49 = arith.constant 0 : index
    %c0_50 = arith.constant 0 : index
    %63 = vector.load %arg2[%c0_49, %c0_50] : memref<64x64xf32, #tpu.memory_space<vmem>>, vector<64x64xf32>
    %c0_51 = arith.constant 0 : index
    %c0_52 = arith.constant 0 : index
    %64 = vector.load %arg5[%c0_51, %c0_52] : memref<1x64xf32, #tpu.memory_space<vmem>>, vector<1x64xf32>
    %c0_53 = arith.constant 0 : index
    %c0_54 = arith.constant 0 : index
    %65 = vector.load %arg6[%c0_53, %c0_54] : memref<1x64xf32, #tpu.memory_space<vmem>>, vector<1x64xf32>
    %cst_55 = arith.constant dense<0.000000e+00> : vector<32x64xf32>
    %66 = tpu.matmul %62, %63, %cst_55 {dimension_numbers = #tpu.dot_dimension_numbers<[1], [0], [0], [1], [0, 0, 1, 1], [], []>} : vector<32x64xf32>, vector<64x64xf32>, vector<32x64xf32> -> vector<32x64xf32>
    %cst_56 = arith.constant dense<0.000000e+00> : vector<64xf32>
    %67 = vector.multi_reduction <add>, %66, %cst_56 [0] : vector<32x64xf32> to vector<64xf32>
    %68 = vector.shape_cast %67 : vector<64xf32> to vector<1x64xf32>
    %cst_57 = arith.constant 0.001953125 : f32
    %69 = vector.broadcast %cst_57 : f32 to vector<1x64xf32>
    %70 = arith.mulf %68, %69 : vector<1x64xf32>
    %71 = vector.broadcast %70 : vector<1x64xf32> to vector<32x64xf32>
    %72 = arith.subf %62, %71 : vector<32x64xf32>
    %73 = arith.mulf %72, %72 : vector<32x64xf32>
    %cst_58 = arith.constant dense<0.000000e+00> : vector<32x64xf32>
    %74 = tpu.matmul %73, %63, %cst_58 {dimension_numbers = #tpu.dot_dimension_numbers<[1], [0], [0], [1], [0, 0, 1, 1], [], []>} : vector<32x64xf32>, vector<64x64xf32>, vector<32x64xf32> -> vector<32x64xf32>
    %cst_59 = arith.constant dense<0.000000e+00> : vector<64xf32>
    %75 = vector.multi_reduction <add>, %74, %cst_59 [0] : vector<32x64xf32> to vector<64xf32>
    %76 = vector.shape_cast %75 : vector<64xf32> to vector<1x64xf32>
    %cst_60 = arith.constant 0.001953125 : f32
    %77 = vector.broadcast %cst_60 : f32 to vector<1x64xf32>
    %78 = arith.mulf %76, %77 : vector<1x64xf32>
    %cst_61 = arith.constant 9.99999974E-6 : f32
    %79 = vector.broadcast %cst_61 : f32 to vector<1x64xf32>
    %80 = arith.addf %78, %79 : vector<1x64xf32>
    %81 = math.sqrt %80 : vector<1x64xf32>
    %82 = arith.divf %64, %81 : vector<1x64xf32>
    %83 = arith.mulf %70, %82 : vector<1x64xf32>
    %84 = arith.subf %65, %83 : vector<1x64xf32>
    %85 = vector.broadcast %82 : vector<1x64xf32> to vector<32x64xf32>
    %86 = arith.mulf %62, %85 : vector<32x64xf32>
    %87 = vector.broadcast %84 : vector<1x64xf32> to vector<32x64xf32>
    %88 = arith.addf %86, %87 : vector<32x64xf32>
    %cst_62 = arith.constant 0.000000e+00 : f32
    %89 = vector.broadcast %cst_62 : f32 to vector<32x64xf32>
    %90 = arith.maximumf %88, %89 : vector<32x64xf32>
    %c0_63 = arith.constant 0 : index
    %c0_64 = arith.constant 0 : index
    %91 = vector.load %arg11[%c0_63, %c0_64] : memref<64x64xf32, #tpu.memory_space<vmem>>, vector<64x64xf32>
    %c0_65 = arith.constant 0 : index
    %c0_66 = arith.constant 0 : index
    %92 = vector.load %arg12[%c0_65, %c0_66] : memref<64x64xf32, #tpu.memory_space<vmem>>, vector<64x64xf32>
    %c0_67 = arith.constant 0 : index
    %c0_68 = arith.constant 0 : index
    %93 = vector.load %arg13[%c0_67, %c0_68] : memref<64x64xf32, #tpu.memory_space<vmem>>, vector<64x64xf32>
    %cst_69 = arith.constant 0.000000e+00 : f32
    %94 = vector.broadcast %cst_69 : f32 to vector<36x64xf32>
    %c0_70 = arith.constant 0 : index
    %c0_71 = arith.constant 0 : index
    %95 = vector.load %arg16[%c0_70, %c0_71] : memref<36x64xf32, #tpu.memory_space<vmem>>, vector<36x64xf32>
    tpu.vector_store %arg16[%c0_70, %c0_71], %94 {strides = array<i32>} : memref<36x64xf32, #tpu.memory_space<vmem>>, vector<36x64xf32>,
    %96 = vector.extract_strided_slice %90 {offsets = [0, 0], sizes = [16, 64], strides = [1, 1]} : vector<32x64xf32> to vector<16x64xf32>
    %c1_72 = arith.constant 1 : index
    %c0_73 = arith.constant 0 : index
    %97 = vector.load %arg16[%c1_72, %c0_73] : memref<36x64xf32, #tpu.memory_space<vmem>>, vector<16x64xf32>
    tpu.vector_store %arg16[%c1_72, %c0_73], %96 {strides = array<i32>} : memref<36x64xf32, #tpu.memory_space<vmem>>, vector<16x64xf32>,
    %98 = vector.extract_strided_slice %90 {offsets = [16, 0], sizes = [16, 64], strides = [1, 1]} : vector<32x64xf32> to vector<16x64xf32>
    %c19_74 = arith.constant 19 : index
    %c0_75 = arith.constant 0 : index
    %99 = vector.load %arg16[%c19_74, %c0_75] : memref<36x64xf32, #tpu.memory_space<vmem>>, vector<16x64xf32>
    tpu.vector_store %arg16[%c19_74, %c0_75], %98 {strides = array<i32>} : memref<36x64xf32, #tpu.memory_space<vmem>>, vector<16x64xf32>,
    %c0_76 = arith.constant 0 : index
    %c0_77 = arith.constant 0 : index
    %100 = vector.load %arg16[%c0_76, %c0_77] : memref<36x64xf32, #tpu.memory_space<vmem>>, vector<16x64xf32>
    %cst_78 = arith.constant dense<0.000000e+00> : vector<16x64xf32>
    %101 = tpu.matmul %100, %91, %cst_78 {dimension_numbers = #tpu.dot_dimension_numbers<[1], [0], [0], [1], [0, 0, 1, 1], [], []>} : vector<16x64xf32>, vector<64x64xf32>, vector<16x64xf32> -> vector<16x64xf32>
    %c1_79 = arith.constant 1 : index
    %c0_80 = arith.constant 0 : index
    %102 = vector.load %arg16[%c1_79, %c0_80] : memref<36x64xf32, #tpu.memory_space<vmem>>, vector<16x64xf32>
    %cst_81 = arith.constant dense<0.000000e+00> : vector<16x64xf32>
    %103 = tpu.matmul %102, %92, %cst_81 {dimension_numbers = #tpu.dot_dimension_numbers<[1], [0], [0], [1], [0, 0, 1, 1], [], []>} : vector<16x64xf32>, vector<64x64xf32>, vector<16x64xf32> -> vector<16x64xf32>
    %104 = arith.addf %101, %103 : vector<16x64xf32>
    %c2_82 = arith.constant 2 : index
    %c0_83 = arith.constant 0 : index
    %105 = vector.load %arg16[%c2_82, %c0_83] : memref<36x64xf32, #tpu.memory_space<vmem>>, vector<16x64xf32>
    %cst_84 = arith.constant dense<0.000000e+00> : vector<16x64xf32>
    %106 = tpu.matmul %105, %93, %cst_84 {dimension_numbers = #tpu.dot_dimension_numbers<[1], [0], [0], [1], [0, 0, 1, 1], [], []>} : vector<16x64xf32>, vector<64x64xf32>, vector<16x64xf32> -> vector<16x64xf32>
    %107 = arith.addf %104, %106 : vector<16x64xf32>
    %c0_85 = arith.constant 0 : index
    %c0_86 = arith.constant 0 : index
    %108 = vector.load %arg14[%c0_85, %c0_86] : memref<1x64xf32, #tpu.memory_space<vmem>>, vector<1x64xf32>
    %109 = vector.broadcast %108 : vector<1x64xf32> to vector<16x64xf32>
    %110 = arith.addf %107, %109 : vector<16x64xf32>
    %111 = vector.extract_strided_slice %0 {offsets = [0, 0], sizes = [16, 64], strides = [1, 1]} : vector<32x64xf32> to vector<16x64xf32>
    %112 = arith.addf %110, %111 : vector<16x64xf32>
    %c0_87 = arith.constant 0 : index
    %c0_88 = arith.constant 0 : index
    %113 = vector.load %arg15[%c0_87, %c0_88] : memref<32x64xf32, #tpu.memory_space<vmem>>, vector<16x64xf32>
    tpu.vector_store %arg15[%c0_87, %c0_88], %112 {strides = array<i32>} : memref<32x64xf32, #tpu.memory_space<vmem>>, vector<16x64xf32>,
    %c18_89 = arith.constant 18 : index
    %c0_90 = arith.constant 0 : index
    %114 = vector.load %arg16[%c18_89, %c0_90] : memref<36x64xf32, #tpu.memory_space<vmem>>, vector<16x64xf32>
    %cst_91 = arith.constant dense<0.000000e+00> : vector<16x64xf32>
    %115 = tpu.matmul %114, %91, %cst_91 {dimension_numbers = #tpu.dot_dimension_numbers<[1], [0], [0], [1], [0, 0, 1, 1], [], []>} : vector<16x64xf32>, vector<64x64xf32>, vector<16x64xf32> -> vector<16x64xf32>
    %c19_92 = arith.constant 19 : index
    %c0_93 = arith.constant 0 : index
    %116 = vector.load %arg16[%c19_92, %c0_93] : memref<36x64xf32, #tpu.memory_space<vmem>>, vector<16x64xf32>
    %cst_94 = arith.constant dense<0.000000e+00> : vector<16x64xf32>
    %117 = tpu.matmul %116, %92, %cst_94 {dimension_numbers = #tpu.dot_dimension_numbers<[1], [0], [0], [1], [0, 0, 1, 1], [], []>} : vector<16x64xf32>, vector<64x64xf32>, vector<16x64xf32> -> vector<16x64xf32>
    %118 = arith.addf %115, %117 : vector<16x64xf32>
    %c20_95 = arith.constant 20 : index
    %c0_96 = arith.constant 0 : index
    %119 = vector.load %arg16[%c20_95, %c0_96] : memref<36x64xf32, #tpu.memory_space<vmem>>, vector<16x64xf32>
    %cst_97 = arith.constant dense<0.000000e+00> : vector<16x64xf32>
    %120 = tpu.matmul %119, %93, %cst_97 {dimension_numbers = #tpu.dot_dimension_numbers<[1], [0], [0], [1], [0, 0, 1, 1], [], []>} : vector<16x64xf32>, vector<64x64xf32>, vector<16x64xf32> -> vector<16x64xf32>
    %121 = arith.addf %118, %120 : vector<16x64xf32>
    %c0_98 = arith.constant 0 : index
    %c0_99 = arith.constant 0 : index
    %122 = vector.load %arg14[%c0_98, %c0_99] : memref<1x64xf32, #tpu.memory_space<vmem>>, vector<1x64xf32>
    %123 = vector.broadcast %122 : vector<1x64xf32> to vector<16x64xf32>
    %124 = arith.addf %121, %123 : vector<16x64xf32>
    %125 = vector.extract_strided_slice %0 {offsets = [16, 0], sizes = [16, 64], strides = [1, 1]} : vector<32x64xf32> to vector<16x64xf32>
    %126 = arith.addf %124, %125 : vector<16x64xf32>
    %c16_100 = arith.constant 16 : index
    %c0_101 = arith.constant 0 : index
    %127 = vector.load %arg15[%c16_100, %c0_101] : memref<32x64xf32, #tpu.memory_space<vmem>>, vector<16x64xf32>
    tpu.vector_store %arg15[%c16_100, %c0_101], %126 {strides = array<i32>} : memref<32x64xf32, #tpu.memory_space<vmem>>, vector<16x64xf32>,
    return
  }
  func.func @transform_0(%arg0: i32) -> (i32, i32) {
    %c0_i32 = arith.constant 0 : i32
    %c0_i32_0 = arith.constant 0 : i32
    %c0_i32_1 = arith.constant 0 : i32
    return %c0_i32, %c0_i32_0 : i32, i32
  }
  func.func @transform_1(%arg0: i32) -> (i32, i32) {
    %c0_i32 = arith.constant 0 : i32
    %c0_i32_0 = arith.constant 0 : i32
    %c0_i32_1 = arith.constant 0 : i32
    return %c0_i32, %c0_i32_0 : i32, i32
  }
  func.func @transform_2(%arg0: i32) -> (i32, i32) {
    %c0_i32 = arith.constant 0 : i32
    %c0_i32_0 = arith.constant 0 : i32
    %c0_i32_1 = arith.constant 0 : i32
    return %c0_i32, %c0_i32_0 : i32, i32
  }
  func.func @transform_3(%arg0: i32) -> (i32, i32) {
    %c0_i32 = arith.constant 0 : i32
    %c0_i32_0 = arith.constant 0 : i32
    %c0_i32_1 = arith.constant 0 : i32
    return %c0_i32, %c0_i32_0 : i32, i32
  }
  func.func @transform_4(%arg0: i32) -> (i32, i32) {
    %c0_i32 = arith.constant 0 : i32
    %c0_i32_0 = arith.constant 0 : i32
    %c0_i32_1 = arith.constant 0 : i32
    return %c0_i32, %c0_i32_0 : i32, i32
  }
  func.func @transform_5(%arg0: i32) -> (i32, i32) {
    %c0_i32 = arith.constant 0 : i32
    %c0_i32_0 = arith.constant 0 : i32
    %c0_i32_1 = arith.constant 0 : i32
    return %c0_i32, %c0_i32_0 : i32, i32
  }
  func.func @transform_6(%arg0: i32) -> (i32, i32) {
    %c0_i32 = arith.constant 0 : i32
    %c0_i32_0 = arith.constant 0 : i32
    %c0_i32_1 = arith.constant 0 : i32
    return %c0_i32, %c0_i32_0 : i32, i32
  }
  func.func @transform_7(%arg0: i32) -> (i32, i32) {
    %c0_i32 = arith.constant 0 : i32
    %c0_i32_0 = arith.constant 0 : i32
    %c0_i32_1 = arith.constant 0 : i32
    return %c0_i32, %c0_i32_0 : i32, i32
  }
  func.func @transform_8(%arg0: i32) -> (i32, i32) {
    %c0_i32 = arith.constant 0 : i32
    %c0_i32_0 = arith.constant 0 : i32
    %c0_i32_1 = arith.constant 0 : i32
    return %c0_i32, %c0_i32_0 : i32, i32
  }
  func.func @transform_9(%arg0: i32) -> (i32, i32) {
    %c0_i32 = arith.constant 0 : i32
    %c0_i32_0 = arith.constant 0 : i32
    %c0_i32_1 = arith.constant 0 : i32
    return %c0_i32, %c0_i32_0 : i32, i32
  }
  func.func @transform_10(%arg0: i32) -> (i32, i32) {
    %c0_i32 = arith.constant 0 : i32
    %c0_i32_0 = arith.constant 0 : i32
    %c0_i32_1 = arith.constant 0 : i32
    return %c0_i32, %c0_i32_0 : i32, i32
  }
  func.func @transform_11(%arg0: i32) -> (i32, i32) {
    %c0_i32 = arith.constant 0 : i32
    %c0_i32_0 = arith.constant 0 : i32
    %c0_i32_1 = arith.constant 0 : i32
    return %c0_i32, %c0_i32_0 : i32, i32
  }
  func.func @transform_12(%arg0: i32) -> (i32, i32) {
    %c0_i32 = arith.constant 0 : i32
    %c0_i32_0 = arith.constant 0 : i32
    %c0_i32_1 = arith.constant 0 : i32
    return %c0_i32, %c0_i32_0 : i32, i32
  }
  func.func @transform_13(%arg0: i32) -> (i32, i32) {
    %c0_i32 = arith.constant 0 : i32
    %c0_i32_0 = arith.constant 0 : i32
    %c0_i32_1 = arith.constant 0 : i32
    return %c0_i32, %c0_i32_0 : i32, i32
  }
  func.func @transform_14(%arg0: i32) -> (i32, i32) {
    %c0_i32 = arith.constant 0 : i32
    %c0_i32_0 = arith.constant 0 : i32
    %c0_i32_1 = arith.constant 0 : i32
    return %c0_i32, %c0_i32_0 : i32, i32
  }
}

</mosaic_0001>

<llo_original>
// kernel: tpu_custom_call.1
$region0: #{tpu_custom_call.1}
  #allocation0 [shape = 'u32[]', space=smem, size = 0x4, offset = 0x4, fixed_abs, tag = 'smem constant byte address 0x4 - core index']
  #allocation1 [shape = 'u32[144,128]{1,0:T(1,128)}', space=vmem, size = 0x12000, scoped, tag = 'internal scratch']
  #allocation2 [shape = 'f32[36,64]{1,0:T(8,128)}', space=vmem, size = 0x5000, scoped, tag = 'scratch operand']
  #allocation3 [shape = 'f32[32,64]{1,0:T(8,128)}', space=vmem, size = 0x4000, scoped, tag = 'scratch operand']
  %s0 = inlined_call_operand.hbm [shape: f32[32,64], index: 0, kind: input, shape index: {}]
  %s1 = inlined_call_operand.hbm [shape: f32[64,64], index: 1, kind: input, shape index: {}]
  %s2 = inlined_call_operand.vmem [shape: f32[1,64], index: 2, kind: input, shape index: {}]
  %s3 = inlined_call_operand.vmem [shape: f32[1,64], index: 3, kind: input, shape index: {}]
  %s4 = inlined_call_operand.vmem [shape: f32[1,64], index: 4, kind: input, shape index: {}]
  %s5 = inlined_call_operand.vmem [shape: f32[1,64], index: 5, kind: input, shape index: {}]
  %s6 = inlined_call_operand.hbm [shape: f32[64,64], index: 6, kind: input, shape index: {}]
  %s7 = inlined_call_operand.hbm [shape: f32[64,64], index: 7, kind: input, shape index: {}]
  %s8 = inlined_call_operand.hbm [shape: f32[64,64], index: 8, kind: input, shape index: {}]
  %s9 = inlined_call_operand.vmem [shape: f32[1,64], index: 9, kind: input, shape index: {}]
  %s10 = inlined_call_operand.hbm [shape: f32[64,64], index: 10, kind: input, shape index: {}]
  %s11 = inlined_call_operand.hbm [shape: f32[64,64], index: 11, kind: input, shape index: {}]
  %s12 = inlined_call_operand.hbm [shape: f32[64,64], index: 12, kind: input, shape index: {}]
  %s13 = inlined_call_operand.vmem [shape: f32[1,64], index: 13, kind: input, shape index: {}]
  %s14 = inlined_call_operand.hbm [shape: f32[32,64], index: 14, kind: output, shape index: {}]
  %s15 = sld [smem:[#allocation0]]
  $region98: #{tpu_custom_call.1} parent=0
    _
  %s17 = ssub.s32 1, %s15
  %s18 = scalar_select 0, %s17, %s15
  $region1: #{tpu_custom_call.1} parent=0
    #allocation4 [shape = 'u8[16384]{0}', space=vmem, size = 0x4000, scoped, tag = 'input window, operand 0, single buffered']
    #allocation5 [shape = 's32[1]{0}', space=sflag, size = 0x4, scoped, tag = 'scoped memory for tpu_custom_call.1']
    #allocation6 [shape = 's32[1]{0}', space=sflag, size = 0x4, scoped, tag = 'scoped memory for tpu_custom_call.1']
    #allocation7 [shape = 'u8[32768]{0}', space=vmem, size = 0x8000, scoped, tag = 'input window, operand 1, single buffered']
    #allocation8 [shape = 's32[1]{0}', space=sflag, size = 0x4, scoped, tag = 'scoped memory for tpu_custom_call.1']
    #allocation9 [shape = 'u8[32768]{0}', space=vmem, size = 0x8000, scoped, tag = 'input window, operand 6, single buffered']
    #allocation10 [shape = 'u8[32768]{0}', space=vmem, size = 0x8000, scoped, tag = 'input window, operand 7, single buffered']
    #allocation11 [shape = 's32[1]{0}', space=sflag, size = 0x4, scoped, tag = 'scoped memory for tpu_custom_call.1']
    #allocation12 [shape = 'u8[32768]{0}', space=vmem, size = 0x8000, scoped, tag = 'input window, operand 8, single buffered']
    #allocation13 [shape = 'u8[32768]{0}', space=vmem, size = 0x8000, scoped, tag = 'input window, operand 10, single buffered']
    #allocation14 [shape = 's32[1]{0}', space=sflag, size = 0x4, scoped, tag = 'scoped memory for tpu_custom_call.1']
    #allocation15 [shape = 'u8[32768]{0}', space=vmem, size = 0x8000, scoped, tag = 'input window, operand 11, single buffered']
    #allocation16 [shape = 'u8[32768]{0}', space=vmem, size = 0x8000, scoped, tag = 'input window, operand 12, single buffered']
    #allocation17 [shape = 's32[1]{0}', space=sflag, size = 0x4, scoped, tag = 'scoped memory for tpu_custom_call.1']
    #allocation18 [shape = 'u8[16384]{0}', space=vmem, size = 0x4000, scoped, tag = 'output window, operand 0, single buffered']
    %19 = vsyncpa [#allocation5], 0
    %20 = vsyncpa [#allocation8], 0
    %21 = vsyncpa [#allocation11], 0
    %22 = vsyncpa [#allocation14], 0
    %23 = vsyncpa [#allocation17], 0
    %24 = vsyncpa [#allocation6], 0
    // Predicated region
    $region2: #{tpu_custom_call.1} parent=1 // pred_check
      _
    $region3: #{tpu_custom_call.1} parent=1 // pred_check_branch
      %26 = sbr.rel (0) target = $region5
    $region4: #{tpu_custom_call.1} parent=1 // pred_region
      %s28 = ssub.s32 512, 512
      %29 = vsyncadd [#allocation5], %s28
      %s30 = sshll.u32 [#allocation4], 4
      %s31 = int_to_ptr.vmem [resolvable:$true] %s30
      %36 = dma.hbm_to_vmem [thread:$0]  %s0, 512, %s31, [#allocation5], 128, 128, 8
    $region5: #{tpu_custom_call.1} parent=1 // pred_fallthru
      _
    // Predicated region
    $region6: #{tpu_custom_call.1} parent=1 // pred_check
      _
    $region7: #{tpu_custom_call.1} parent=1 // pred_check_branch
      %38 = sbr.rel (0) target = $region9
    $region8: #{tpu_custom_call.1} parent=1 // pred_region
      %s40 = ssub.s32 1024, 1024
      %41 = vsyncadd [#allocation8], %s40
      %s42 = sshll.u32 [#allocation7], 4
      %s43 = int_to_ptr.vmem [resolvable:$true] %s42
      %48 = dma.hbm_to_vmem [thread:$0]  %s1, 1024, %s43, [#allocation8], 128, 128, 8
    $region9: #{tpu_custom_call.1} parent=1 // pred_fallthru
      _
    // Predicated region
    $region10: #{tpu_custom_call.1} parent=1 // pred_check
      _
    $region11: #{tpu_custom_call.1} parent=1 // pred_check_branch
      %50 = sbr.rel (0) target = $region13
    $region12: #{tpu_custom_call.1} parent=1 // pred_region
      _
    $region13: #{tpu_custom_call.1} parent=1 // pred_fallthru
      _
    // Predicated region
    $region14: #{tpu_custom_call.1} parent=1 // pred_check
      _
    $region15: #{tpu_custom_call.1} parent=1 // pred_check_branch
      %52 = sbr.rel (0) target = $region17
    $region16: #{tpu_custom_call.1} parent=1 // pred_region
      _
    $region17: #{tpu_custom_call.1} parent=1 // pred_fallthru
      _
    // Predicated region
    $region18: #{tpu_custom_call.1} parent=1 // pred_check
      _
    $region19: #{tpu_custom_call.1} parent=1 // pred_check_branch
      %54 = sbr.rel (0) target = $region21
    $region20: #{tpu_custom_call.1} parent=1 // pred_region
      _
    $region21: #{tpu_custom_call.1} parent=1 // pred_fallthru
      _
    // Predicated region
    $region22: #{tpu_custom_call.1} parent=1 // pred_check
      _
    $region23: #{tpu_custom_call.1} parent=1 // pred_check_branch
      %56 = sbr.rel (0) target = $region25
    $region24: #{tpu_custom_call.1} parent=1 // pred_region
      _
    $region25: #{tpu_custom_call.1} parent=1 // pred_fallthru
      _
    // Predicated region
    $region26: #{tpu_custom_call.1} parent=1 // pred_check
      _
    $region27: #{tpu_custom_call.1} parent=1 // pred_check_branch
      %58 = sbr.rel (0) target = $region29
    $region28: #{tpu_custom_call.1} parent=1 // pred_region
      %s60 = ssub.s32 1024, 1024
      %61 = vsyncadd [#allocation8], %s60
      %s62 = sshll.u32 [#allocation9], 4
      %s63 = int_to_ptr.vmem [resolvable:$true] %s62
      %68 = dma.hbm_to_vmem [thread:$0]  %s6, 1024, %s63, [#allocation8], 128, 128, 8
    $region29: #{tpu_custom_call.1} parent=1 // pred_fallthru
      _
    // Predicated region
    $region30: #{tpu_custom_call.1} parent=1 // pred_check
      _
    $region31: #{tpu_custom_call.1} parent=1 // pred_check_branch
      %70 = sbr.rel (0) target = $region33
    $region32: #{tpu_custom_call.1} parent=1 // pred_region
      %s72 = ssub.s32 1024, 1024
      %73 = vsyncadd [#allocation11], %s72
      %s74 = sshll.u32 [#allocation10], 4
      %s75 = int_to_ptr.vmem [resolvable:$true] %s74
      %80 = dma.hbm_to_vmem [thread:$0]  %s7, 1024, %s75, [#allocation11], 128, 128, 8
    $region33: #{tpu_custom_call.1} parent=1 // pred_fallthru
      _
    // Predicated region
    $region34: #{tpu_custom_call.1} parent=1 // pred_check
      _
    $region35: #{tpu_custom_call.1} parent=1 // pred_check_branch
      %82 = sbr.rel (0) target = $region37
    $region36: #{tpu_custom_call.1} parent=1 // pred_region
      %s84 = ssub.s32 1024, 1024
      %85 = vsyncadd [#allocation11], %s84
      %s86 = sshll.u32 [#allocation12], 4
      %s87 = int_to_ptr.vmem [resolvable:$true] %s86
      %92 = dma.hbm_to_vmem [thread:$0]  %s8, 1024, %s87, [#allocation11], 128, 128, 8
    $region37: #{tpu_custom_call.1} parent=1 // pred_fallthru
      _
    // Predicated region
    $region38: #{tpu_custom_call.1} parent=1 // pred_check
      _
    $region39: #{tpu_custom_call.1} parent=1 // pred_check_branch
      %94 = sbr.rel (0) target = $region41
    $region40: #{tpu_custom_call.1} parent=1 // pred_region
      _
    $region41: #{tpu_custom_call.1} parent=1 // pred_fallthru
      _
    // Predicated region
    $region42: #{tpu_custom_call.1} parent=1 // pred_check
      _
    $region43: #{tpu_custom_call.1} parent=1 // pred_check_branch
      %96 = sbr.rel (0) target = $region45
    $region44: #{tpu_custom_call.1} parent=1 // pred_region
      %s98 = ssub.s32 1024, 1024
      %99 = vsyncadd [#allocation14], %s98
      %s100 = sshll.u32 [#allocation13], 4
      %s101 = int_to_ptr.vmem [resolvable:$true] %s100
      %106 = dma.hbm_to_vmem [thread:$0]  %s10, 1024, %s101, [#allocation14], 128, 128, 8
    $region45: #{tpu_custom_call.1} parent=1 // pred_fallthru
      _
    // Predicated region
    $region46: #{tpu_custom_call.1} parent=1 // pred_check
      _
    $region47: #{tpu_custom_call.1} parent=1 // pred_check_branch
      %108 = sbr.rel (0) target = $region49
    $region48: #{tpu_custom_call.1} parent=1 // pred_region
      %s110 = ssub.s32 1024, 1024
      %111 = vsyncadd [#allocation14], %s110
      %s112 = sshll.u32 [#allocation15], 4
      %s113 = int_to_ptr.vmem [resolvable:$true] %s112
      %118 = dma.hbm_to_vmem [thread:$0]  %s11, 1024, %s113, [#allocation14], 128, 128, 8
    $region49: #{tpu_custom_call.1} parent=1 // pred_fallthru
      _
    // Predicated region
    $region50: #{tpu_custom_call.1} parent=1 // pred_check
      _
    $region51: #{tpu_custom_call.1} parent=1 // pred_check_branch
      %120 = sbr.rel (0) target = $region53
    $region52: #{tpu_custom_call.1} parent=1 // pred_region
      %s122 = ssub.s32 1024, 1024
      %123 = vsyncadd [#allocation17], %s122
      %s124 = sshll.u32 [#allocation16], 4
      %s125 = int_to_ptr.vmem [resolvable:$true] %s124
      %130 = dma.hbm_to_vmem [thread:$0]  %s12, 1024, %s125, [#allocation17], 128, 128, 8
    $region53: #{tpu_custom_call.1} parent=1 // pred_fallthru
      _
    // Predicated region
    $region54: #{tpu_custom_call.1} parent=1 // pred_check
      _
    $region55: #{tpu_custom_call.1} parent=1 // pred_check_branch
      %132 = sbr.rel (0) target = $region57
    $region56: #{tpu_custom_call.1} parent=1 // pred_region
      _
    $region57: #{tpu_custom_call.1} parent=1 // pred_fallthru
      _
    // Predicated region
    $region58: #{tpu_custom_call.1} parent=1 // pred_check
      _
    $region59: #{tpu_custom_call.1} parent=1 // pred_check_branch
      %134 = sbr.rel (0) target = $region61
    $region60: #{tpu_custom_call.1} parent=1 // pred_region
      %135 = dma.done [#allocation5], 512
    $region61: #{tpu_custom_call.1} parent=1 // pred_fallthru
      _
    // Predicated region
    $region62: #{tpu_custom_call.1} parent=1 // pred_check
      _
    $region63: #{tpu_custom_call.1} parent=1 // pred_check_branch
      %137 = sbr.rel (0) target = $region65
    $region64: #{tpu_custom_call.1} parent=1 // pred_region
      %138 = dma.done [#allocation8], 1024
    $region65: #{tpu_custom_call.1} parent=1 // pred_fallthru
      _
    // Predicated region
    $region66: #{tpu_custom_call.1} parent=1 // pred_check
      _
    $region67: #{tpu_custom_call.1} parent=1 // pred_check_branch
      %140 = sbr.rel (0) target = $region69
    $region68: #{tpu_custom_call.1} parent=1 // pred_region
      %141 = dma.done [#allocation8], 1024
    $region69: #{tpu_custom_call.1} parent=1 // pred_fallthru
      _
    // Predicated region
    $region70: #{tpu_custom_call.1} parent=1 // pred_check
      _
    $region71: #{tpu_custom_call.1} parent=1 // pred_check_branch
      %143 = sbr.rel (0) target = $region73
    $region72: #{tpu_custom_call.1} parent=1 // pred_region
      %144 = dma.done [#allocation11], 1024
    $region73: #{tpu_custom_call.1} parent=1 // pred_fallthru
      _
    // Predicated region
    $region74: #{tpu_custom_call.1} parent=1 // pred_check
      _
    $region75: #{tpu_custom_call.1} parent=1 // pred_check_branch
      %146 = sbr.rel (0) target = $region77
    $region76: #{tpu_custom_call.1} parent=1 // pred_region
      %147 = dma.done [#allocation11], 1024
    $region77: #{tpu_custom_call.1} parent=1 // pred_fallthru
      _
    // Predicated region
    $region78: #{tpu_custom_call.1} parent=1 // pred_check
      _
    $region79: #{tpu_custom_call.1} parent=1 // pred_check_branch
      %149 = sbr.rel (0) target = $region81
    $region80: #{tpu_custom_call.1} parent=1 // pred_region
      %150 = dma.done [#allocation14], 1024
    $region81: #{tpu_custom_call.1} parent=1 // pred_fallthru
      _
    // Predicated region
    $region82: #{tpu_custom_call.1} parent=1 // pred_check
      _
    $region83: #{tpu_custom_call.1} parent=1 // pred_check_branch
      %152 = sbr.rel (0) target = $region85
    $region84: #{tpu_custom_call.1} parent=1 // pred_region
      %153 = dma.done [#allocation14], 1024
    $region85: #{tpu_custom_call.1} parent=1 // pred_fallthru
      _
    // Predicated region
    $region86: #{tpu_custom_call.1} parent=1 // pred_check
      _
    $region87: #{tpu_custom_call.1} parent=1 // pred_check_branch
      %155 = sbr.rel (0) target = $region89
    $region88: #{tpu_custom_call.1} parent=1 // pred_region
      %156 = dma.done [#allocation17], 1024
    $region89: #{tpu_custom_call.1} parent=1 // pred_fallthru
      _
    %v157 = vld [vmem:[#allocation4] sm:$0xff]
    %v158 = vld [vmem:[#allocation4 + $0x8] sm:$0xff]
    %v159 = vld [vmem:[#allocation4 + $0x10] sm:$0xff]
    %v160 = vld [vmem:[#allocation4 + $0x18] sm:$0xff]
    %v161 = vld [vmem:[#allocation7] sm:$0xff]
    %v162 = vld [vmem:[#allocation7 + $0x8] sm:$0xff]
    %v163 = vld [vmem:[#allocation7 + $0x10] sm:$0xff]
    %v164 = vld [vmem:[#allocation7 + $0x18] sm:$0xff]
    %v165 = vld [vmem:[#allocation7 + $0x20] sm:$0xff]
    %v166 = vld [vmem:[#allocation7 + $0x28] sm:$0xff]
    %v167 = vld [vmem:[#allocation7 + $0x30] sm:$0xff]
    %v168 = vld [vmem:[#allocation7 + $0x38] sm:$0xff]
    %v169 = vld [vmem:[%s2] sm:$0x1]
    %v170 = vld [vmem:[%s3] sm:$0x1]
    %vm171 = vcmask 523264
    %v173 = vsel %vm171, %v157, 0
    %v176 = vsel %vm171, %v158, 0
    %v179 = vsel %vm171, %v159, 0
    %v182 = vsel %vm171, %v160, 0
    %184 = vmatprep.subr.mxu0 0.0
    %185 = vmatpush1.msra.mxu0 %v161
    %186 = vmatprep.subr.mxu0 0.0
    %187 = vmatpush1.msra.mxu0 %v162
    %188 = vmatprep.subr.mxu0 0.0
    %189 = vmatpush1.msra.mxu0 %v163
    %190 = vmatprep.subr.mxu0 0.0
    %191 = vmatpush1.msra.mxu0 %v164
    %192 = vmatprep.subr.mxu0 0.0
    %193 = vmatpush1.msra.mxu0 %v165
    %194 = vmatprep.subr.mxu0 0.0
    %195 = vmatpush1.msra.mxu0 %v166
    %196 = vmatprep.subr.mxu0 0.0
    %197 = vmatpush1.msra.mxu0 %v167
    %198 = vmatprep.subr.mxu0 0.0
    %199 = vmatpush1.msra.mxu0 %v168
    %200 = vmatprep.subr.mxu0 0.0
    %201 = vmatpush1.msra.mxu0 0.0
    %202 = vmatprep.subr.mxu0 0.0
    %203 = vmatpush1.msra.mxu0 0.0
    %204 = vmatprep.subr.mxu0 0.0
    %205 = vmatpush1.msra.mxu0 0.0
    %206 = vmatprep.subr.mxu0 0.0
    %207 = vmatpush1.msra.mxu0 0.0
    %208 = vmatprep.subr.mxu0 0.0
    %209 = vmatpush1.msra.mxu0 0.0
    %210 = vmatprep.subr.mxu0 0.0
    %211 = vmatpush1.msra.mxu0 0.0
    %212 = vmatprep.subr.mxu0 0.0
    %213 = vmatpush1.msra.mxu0 0.0
    %214 = vmatprep.subr.mxu0 0.0
    %215 = vmatpush1.msra.mxu0 0.0
    %216 = vmatprep.subr.mxu0 0.0
    %217 = vmatpush1.msra.mxu0 0.0
    %218 = vmatprep.subr.mxu0 0.0
    %219 = vmatpush1.msra.mxu0 0.0
    %220 = vmatprep.subr.mxu0 0.0
    %221 = vmatpush1.msra.mxu0 0.0
    %222 = vmatprep.subr.mxu0 0.0
    %223 = vmatpush1.msra.mxu0 0.0
    %224 = vmatprep.subr.mxu0 0.0
    %225 = vmatpush1.msra.mxu0 0.0
    %226 = vmatprep.subr.mxu0 0.0
    %227 = vmatpush1.msra.mxu0 0.0
    %228 = vmatprep.subr.mxu0 0.0
    %229 = vmatpush1.msra.mxu0 0.0
    %230 = vmatprep.subr.mxu0 0.0
    %231 = vmatpush1.msra.mxu0 0.0
    %232 = vmatprep.subr.mxu0 0.0
    %233 = vmatpush1.msra.mxu0 0.0
    %234 = vmatprep.subr.mxu0 0.0
    %235 = vmatpush1.msra.mxu0 0.0
    %236 = vmatprep.subr.mxu0 0.0
    %237 = vmatpush1.msra.mxu0 0.0
    %238 = vmatprep.subr.mxu0 0.0
    %239 = vmatpush1.msra.mxu0 0.0
    %240 = vmatprep.subr.mxu0 0.0
    %241 = vmatpush1.msra.mxu0 0.0
    %242 = vmatprep.subr.mxu0 0.0
    %243 = vmatpush1.msra.mxu0 0.0
    %244 = vmatprep.subr.mxu0 0.0
    %245 = vmatpush1.msra.mxu0 0.0
    %246 = vmatprep.subr.mxu0 0.0
    %247 = vmatpush1.msra.mxu0 0.0
    %248 = vmatprep.mubr.f32.mxu0 0.0
    %249 = vmatmul.mubr.f32.gmra.mrb[0].mxu0 %v173
    %v250 = vpop.f32.mrb[0].mxu0
    %v251 = vadd.f32 0.0, %v250
    %v252 = vpop.f32.mrb[0].mxu0
    %253 = vmatprep.mubr.f32.mxu0 0.0
    %254 = vmatmul.mubr.f32.gmra.mrb[0].mxu0 %v176
    %v255 = vpop.f32.mrb[0].mxu0
    %v256 = vadd.f32 0.0, %v255
    %v257 = vpop.f32.mrb[0].mxu0
    %258 = vmatprep.mubr.f32.mxu0 0.0
    %259 = vmatmul.mubr.f32.gmra.mrb[0].mxu0 %v179
    %v260 = vpop.f32.mrb[0].mxu0
    %v261 = vadd.f32 0.0, %v260
    %v262 = vpop.f32.mrb[0].mxu0
    %263 = vmatprep.mubr.f32.mxu0 0.0
    %264 = vmatmul.mubr.f32.gmra.mrb[0].mxu0 %v182
    %v265 = vpop.f32.mrb[0].mxu0
    %v266 = vadd.f32 0.0, %v265
    %v267 = vpop.f32.mrb[0].mxu0
    %268 = vdwg.mxu0
    %v269 = vsel %vm171, %v251, 0.0
    %v270 = vsel %vm171, %v256, 0.0
    %v271 = vadd.f32 %v269, %v270
    %v272 = vsel %vm171, %v261, 0.0
    %v273 = vadd.f32 %v271, %v272
    %v274 = vsel %vm171, %v266, 0.0
    %v275 = vadd.f32 %v273, %v274
    %v276 = vrot.slane %v275, 4
    %v277 = vadd.f32 %v275, %v276
    %v278 = vrot.slane %v277, 2
    %v279 = vadd.f32 %v277, %v278
    %v280 = vrot.slane %v279, 1
    %v281 = vadd.f32 %v279, %v280
    %v282 = vmul.f32 %v281, 0.001953125
    %v283 = vsub.f32 %v157, %v282
    %v284 = vsub.f32 %v158, %v282
    %v285 = vsub.f32 %v159, %v282
    %v286 = vsub.f32 %v160, %v282
    %v287 = vmul.f32 %v283, %v283
    %v288 = vmul.f32 %v284, %v284
    %v289 = vmul.f32 %v285, %v285
    %v290 = vmul.f32 %v286, %v286
    %v292 = vsel %vm171, %v287, 0
    %v295 = vsel %vm171, %v288, 0
    %v298 = vsel %vm171, %v289, 0
    %v301 = vsel %vm171, %v290, 0
    %303 = vmatprep.subr.mxu0 0.0
    %304 = vmatpush1.msra.mxu0 %v161
    %305 = vmatprep.subr.mxu0 0.0
    %306 = vmatpush1.msra.mxu0 %v162
    %307 = vmatprep.subr.mxu0 0.0
    %308 = vmatpush1.msra.mxu0 %v163
    %309 = vmatprep.subr.mxu0 0.0
    %310 = vmatpush1.msra.mxu0 %v164
    %311 = vmatprep.subr.mxu0 0.0
    %312 = vmatpush1.msra.mxu0 %v165
    %313 = vmatprep.subr.mxu0 0.0
    %314 = vmatpush1.msra.mxu0 %v166
    %315 = vmatprep.subr.mxu0 0.0
    %316 = vmatpush1.msra.mxu0 %v167
    %317 = vmatprep.subr.mxu0 0.0
    %318 = vmatpush1.msra.mxu0 %v168
    %319 = vmatprep.subr.mxu0 0.0
    %320 = vmatpush1.msra.mxu0 0.0
    %321 = vmatprep.subr.mxu0 0.0
    %322 = vmatpush1.msra.mxu0 0.0
    %323 = vmatprep.subr.mxu0 0.0
    %324 = vmatpush1.msra.mxu0 0.0
    %325 = vmatprep.subr.mxu0 0.0
    %326 = vmatpush1.msra.mxu0 0.0
    %327 = vmatprep.subr.mxu0 0.0
    %328 = vmatpush1.msra.mxu0 0.0
    %329 = vmatprep.subr.mxu0 0.0
    %330 = vmatpush1.msra.mxu0 0.0
    %331 = vmatprep.subr.mxu0 0.0
    %332 = vmatpush1.msra.mxu0 0.0
    %333 = vmatprep.subr.mxu0 0.0
    %334 = vmatpush1.msra.mxu0 0.0
    %335 = vmatprep.subr.mxu0 0.0
    %336 = vmatpush1.msra.mxu0 0.0
    %337 = vmatprep.subr.mxu0 0.0
    %338 = vmatpush1.msra.mxu0 0.0
    %339 = vmatprep.subr.mxu0 0.0
    %340 = vmatpush1.msra.mxu0 0.0
    %341 = vmatprep.subr.mxu0 0.0
    %342 = vmatpush1.msra.mxu0 0.0
    %343 = vmatprep.subr.mxu0 0.0
    %344 = vmatpush1.msra.mxu0 0.0
    %345 = vmatprep.subr.mxu0 0.0
    %346 = vmatpush1.msra.mxu0 0.0
    %347 = vmatprep.subr.mxu0 0.0
    %348 = vmatpush1.msra.mxu0 0.0
    %349 = vmatprep.subr.mxu0 0.0
    %350 = vmatpush1.msra.mxu0 0.0
    %351 = vmatprep.subr.mxu0 0.0
    %352 = vmatpush1.msra.mxu0 0.0
    %353 = vmatprep.subr.mxu0 0.0
    %354 = vmatpush1.msra.mxu0 0.0
    %355 = vmatprep.subr.mxu0 0.0
    %356 = vmatpush1.msra.mxu0 0.0
    %357 = vmatprep.subr.mxu0 0.0
    %358 = vmatpush1.msra.mxu0 0.0
    %359 = vmatprep.subr.mxu0 0.0
    %360 = vmatpush1.msra.mxu0 0.0
    %361 = vmatprep.subr.mxu0 0.0
    %362 = vmatpush1.msra.mxu0 0.0
    %363 = vmatprep.subr.mxu0 0.0
    %364 = vmatpush1.msra.mxu0 0.0
    %365 = vmatprep.subr.mxu0 0.0
    %366 = vmatpush1.msra.mxu0 0.0
    %367 = vmatprep.mubr.f32.mxu0 0.0
    %368 = vmatmul.mubr.f32.gmra.mrb[0].mxu0 %v292
    %v369 = vpop.f32.mrb[0].mxu0
    %v370 = vadd.f32 0.0, %v369
    %v371 = vpop.f32.mrb[0].mxu0
    %372 = vmatprep.mubr.f32.mxu0 0.0
    %373 = vmatmul.mubr.f32.gmra.mrb[0].mxu0 %v295
    %v374 = vpop.f32.mrb[0].mxu0
    %v375 = vadd.f32 0.0, %v374
    %v376 = vpop.f32.mrb[0].mxu0
    %377 = vmatprep.mubr.f32.mxu0 0.0
    %378 = vmatmul.mubr.f32.gmra.mrb[0].mxu0 %v298
    %v379 = vpop.f32.mrb[0].mxu0
    %v380 = vadd.f32 0.0, %v379
    %v381 = vpop.f32.mrb[0].mxu0
    %382 = vmatprep.mubr.f32.mxu0 0.0
    %383 = vmatmul.mubr.f32.gmra.mrb[0].mxu0 %v301
    %v384 = vpop.f32.mrb[0].mxu0
    %v385 = vadd.f32 0.0, %v384
    %v386 = vpop.f32.mrb[0].mxu0
    %387 = vdwg.mxu0
    %v388 = vsel %vm171, %v370, 0.0
    %v389 = vsel %vm171, %v375, 0.0
    %v390 = vadd.f32 %v388, %v389
    %v391 = vsel %vm171, %v380, 0.0
    %v392 = vadd.f32 %v390, %v391
    %v393 = vsel %vm171, %v385, 0.0
    %v394 = vadd.f32 %v392, %v393
    %v395 = vrot.slane %v394, 4
    %v396 = vadd.f32 %v394, %v395
    %v397 = vrot.slane %v396, 2
    %v398 = vadd.f32 %v396, %v397
    %v399 = vrot.slane %v398, 1
    %v400 = vadd.f32 %v398, %v399
    %v401 = vmul.f32 %v400, 0.001953125
    %v402 = vadd.f32 %v401, 1e-05
    %v403 = vrsqrt.pop %v402
    %v404 = vmul.f32 %v402, %v403
    %vm405 = vcmp.eq.f32.partialorder %v402, inf
    %v406 = vsel %vm405, %v402, %v404
    %vm407 = vcmp.eq.f32.partialorder %v402, 0.0
    %v408 = vand.u32 %v402, 2147483648
    %v409 = vsel %vm407, %v408, %v406
    %v410 = vrcp.pop %v409
    %v411 = vmul.f32 %v169, %v410
    %v412 = vmul.f32 %v282, %v411
    %v413 = vsub.f32 %v170, %v412
    %v415 = vlaneseq
    %v416 = vshrl.u32 %v415, 7
    %v417 = vsub.s32 0, %v416
    %v418 = vrot.slane %v411, %v417
    %v420 = vmul.f32 %v157, %v418
    %v421 = vmul.f32 %v158, %v418
    %v422 = vmul.f32 %v159, %v418
    %v423 = vmul.f32 %v160, %v418
    %v425 = vlaneseq
    %v426 = vshrl.u32 %v425, 7
    %v427 = vsub.s32 0, %v426
    %v428 = vrot.slane %v413, %v427
    %v430 = vadd.f32 %v420, %v428
    %v431 = vadd.f32 %v421, %v428
    %v432 = vadd.f32 %v422, %v428
    %v433 = vadd.f32 %v423, %v428
    %v434 = vmax.f32 %v430, 0.0
    %v435 = vmax.f32 %v431, 0.0
    %v436 = vmax.f32 %v432, 0.0
    %v437 = vmax.f32 %v433, 0.0
    %v438 = vld [vmem:[#allocation9] sm:$0xff]
    %v439 = vld [vmem:[#allocation9 + $0x8] sm:$0xff]
    %v440 = vld [vmem:[#allocation9 + $0x10] sm:$0xff]
    %v441 = vld [vmem:[#allocation9 + $0x18] sm:$0xff]
    %v442 = vld [vmem:[#allocation9 + $0x20] sm:$0xff]
    %v443 = vld [vmem:[#allocation9 + $0x28] sm:$0xff]
    %v444 = vld [vmem:[#allocation9 + $0x30] sm:$0xff]
    %v445 = vld [vmem:[#allocation9 + $0x38] sm:$0xff]
    %v446 = vld [vmem:[#allocation10] sm:$0xff]
    %v447 = vld [vmem:[#allocation10 + $0x8] sm:$0xff]
    %v448 = vld [vmem:[#allocation10 + $0x10] sm:$0xff]
    %v449 = vld [vmem:[#allocation10 + $0x18] sm:$0xff]
    %v450 = vld [vmem:[#allocation10 + $0x20] sm:$0xff]
    %v451 = vld [vmem:[#allocation10 + $0x28] sm:$0xff]
    %v452 = vld [vmem:[#allocation10 + $0x30] sm:$0xff]
    %v453 = vld [vmem:[#allocation10 + $0x38] sm:$0xff]
    %v454 = vld [vmem:[#allocation12] sm:$0xff]
    %v455 = vld [vmem:[#allocation12 + $0x8] sm:$0xff]
    %v456 = vld [vmem:[#allocation12 + $0x10] sm:$0xff]
    %v457 = vld [vmem:[#allocation12 + $0x18] sm:$0xff]
    %v458 = vld [vmem:[#allocation12 + $0x20] sm:$0xff]
    %v459 = vld [vmem:[#allocation12 + $0x28] sm:$0xff]
    %v460 = vld [vmem:[#allocation12 + $0x30] sm:$0xff]
    %v461 = vld [vmem:[#allocation12 + $0x38] sm:$0xff]
    %462 = vst.msk [vmem:[#allocation2] sm:$0xff] %vm171, 0.0
    %463 = vst.msk [vmem:[#allocation2 + $0x8] sm:$0xff] %vm171, 0.0
    %464 = vst.msk [vmem:[#allocation2 + $0x10] sm:$0xff] %vm171, 0.0
    %465 = vst.msk [vmem:[#allocation2 + $0x18] sm:$0xff] %vm171, 0.0
    %vm466 = vcmask 519168
    %467 = vst.msk [vmem:[#allocation2 + $0x20] sm:$0xf] %vm466, 0.0
    %468 = vst.msk [vmem:[#allocation2 + $0x1] sm:$0xff] %vm171, %v434
    %469 = vst.msk [vmem:[#allocation2 + $0x9] sm:$0xff] %vm171, %v435
    %470 = vst.msk [vmem:[#allocation2 + $0x13] sm:$0xff] %vm171, %v436
    %471 = vst.msk [vmem:[#allocation2 + $0x1b] sm:$0xff] %vm171, %v437
    %v472 = vld [vmem:[#allocation2] sm:$0xff]
    %v473 = vld [vmem:[#allocation2 + $0x8] sm:$0xff]
    %v474 = vld [vmem:[#allocation2 + $0x1] sm:$0xff]
    %v475 = vld [vmem:[#allocation2 + $0x9] sm:$0xff]
    %v477 = vsel %vm171, %v474, 0
    %v480 = vsel %vm171, %v475, 0
    %482 = vmatprep.subr.mxu0 0.0
    %483 = vmatpush1.msra.mxu0 %v446
    %484 = vmatprep.subr.mxu0 0.0
    %485 = vmatpush1.msra.mxu0 %v447
    %486 = vmatprep.subr.mxu0 0.0
    %487 = vmatpush1.msra.mxu0 %v448
    %488 = vmatprep.subr.mxu0 0.0
    %489 = vmatpush1.msra.mxu0 %v449
    %490 = vmatprep.subr.mxu0 0.0
    %491 = vmatpush1.msra.mxu0 %v450
    %492 = vmatprep.subr.mxu0 0.0
    %493 = vmatpush1.msra.mxu0 %v451
    %494 = vmatprep.subr.mxu0 0.0
    %495 = vmatpush1.msra.mxu0 %v452
    %496 = vmatprep.subr.mxu0 0.0
    %497 = vmatpush1.msra.mxu0 %v453
    %498 = vmatprep.subr.mxu0 0.0
    %499 = vmatpush1.msra.mxu0 0.0
    %500 = vmatprep.subr.mxu0 0.0
    %501 = vmatpush1.msra.mxu0 0.0
    %502 = vmatprep.subr.mxu0 0.0
    %503 = vmatpush1.msra.mxu0 0.0
    %504 = vmatprep.subr.mxu0 0.0
    %505 = vmatpush1.msra.mxu0 0.0
    %506 = vmatprep.subr.mxu0 0.0
    %507 = vmatpush1.msra.mxu0 0.0
    %508 = vmatprep.subr.mxu0 0.0
    %509 = vmatpush1.msra.mxu0 0.0
    %510 = vmatprep.subr.mxu0 0.0
    %511 = vmatpush1.msra.mxu0 0.0
    %512 = vmatprep.subr.mxu0 0.0
    %513 = vmatpush1.msra.mxu0 0.0
    %514 = vmatprep.subr.mxu0 0.0
    %515 = vmatpush1.msra.mxu0 0.0
    %516 = vmatprep.subr.mxu0 0.0
    %517 = vmatpush1.msra.mxu0 0.0
    %518 = vmatprep.subr.mxu0 0.0
    %519 = vmatpush1.msra.mxu0 0.0
    %520 = vmatprep.subr.mxu0 0.0
    %521 = vmatpush1.msra.mxu0 0.0
    %522 = vmatprep.subr.mxu0 0.0
    %523 = vmatpush1.msra.mxu0 0.0
    %524 = vmatprep.subr.mxu0 0.0
    %525 = vmatpush1.msra.mxu0 0.0
    %526 = vmatprep.subr.mxu0 0.0
    %527 = vmatpush1.msra.mxu0 0.0
    %528 = vmatprep.subr.mxu0 0.0
    %529 = vmatpush1.msra.mxu0 0.0
    %530 = vmatprep.subr.mxu0 0.0
    %531 = vmatpush1.msra.mxu0 0.0
    %532 = vmatprep.subr.mxu0 0.0
    %533 = vmatpush1.msra.mxu0 0.0
    %534 = vmatprep.subr.mxu0 0.0
    %535 = vmatpush1.msra.mxu0 0.0
    %536 = vmatprep.subr.mxu0 0.0
    %537 = vmatpush1.msra.mxu0 0.0
    %538 = vmatprep.subr.mxu0 0.0
    %539 = vmatpush1.msra.mxu0 0.0
    %540 = vmatprep.subr.mxu0 0.0
    %541 = vmatpush1.msra.mxu0 0.0
    %542 = vmatprep.subr.mxu0 0.0
    %543 = vmatpush1.msra.mxu0 0.0
    %544 = vmatprep.subr.mxu0 0.0
    %545 = vmatpush1.msra.mxu0 0.0
    %546 = vmatprep.mubr.f32.mxu0 0.0
    %547 = vmatmul.mubr.f32.gmra.mrb[0].mxu0 %v477
    %v548 = vpop.f32.mrb[0].mxu0
    %v549 = vadd.f32 0.0, %v548
    %v550 = vpop.f32.mrb[0].mxu0
    %551 = vmatprep.mubr.f32.mxu0 0.0
    %552 = vmatmul.mubr.f32.gmra.mrb[0].mxu0 %v480
    %v553 = vpop.f32.mrb[0].mxu0
    %v554 = vadd.f32 0.0, %v553
    %v555 = vpop.f32.mrb[0].mxu0
    %556 = vdwg.mxu0
    %v558 = vsel %vm171, %v472, 0
    %v561 = vsel %vm171, %v473, 0
    %563 = vmatprep.subr.mxu0 0.0
    %564 = vmatpush1.msra.mxu0 %v438
    %565 = vmatprep.subr.mxu0 0.0
    %566 = vmatpush1.msra.mxu0 %v439
    %567 = vmatprep.subr.mxu0 0.0
    %568 = vmatpush1.msra.mxu0 %v440
    %569 = vmatprep.subr.mxu0 0.0
    %570 = vmatpush1.msra.mxu0 %v441
    %571 = vmatprep.subr.mxu0 0.0
    %572 = vmatpush1.msra.mxu0 %v442
    %573 = vmatprep.subr.mxu0 0.0
    %574 = vmatpush1.msra.mxu0 %v443
    %575 = vmatprep.subr.mxu0 0.0
    %576 = vmatpush1.msra.mxu0 %v444
    %577 = vmatprep.subr.mxu0 0.0
    %578 = vmatpush1.msra.mxu0 %v445
    %579 = vmatprep.subr.mxu0 0.0
    %580 = vmatpush1.msra.mxu0 0.0
    %581 = vmatprep.subr.mxu0 0.0
    %582 = vmatpush1.msra.mxu0 0.0
    %583 = vmatprep.subr.mxu0 0.0
    %584 = vmatpush1.msra.mxu0 0.0
    %585 = vmatprep.subr.mxu0 0.0
    %586 = vmatpush1.msra.mxu0 0.0
    %587 = vmatprep.subr.mxu0 0.0
    %588 = vmatpush1.msra.mxu0 0.0
    %589 = vmatprep.subr.mxu0 0.0
    %590 = vmatpush1.msra.mxu0 0.0
    %591 = vmatprep.subr.mxu0 0.0
    %592 = vmatpush1.msra.mxu0 0.0
    %593 = vmatprep.subr.mxu0 0.0
    %594 = vmatpush1.msra.mxu0 0.0
    %595 = vmatprep.subr.mxu0 0.0
    %596 = vmatpush1.msra.mxu0 0.0
    %597 = vmatprep.subr.mxu0 0.0
    %598 = vmatpush1.msra.mxu0 0.0
    %599 = vmatprep.subr.mxu0 0.0
    %600 = vmatpush1.msra.mxu0 0.0
    %601 = vmatprep.subr.mxu0 0.0
    %602 = vmatpush1.msra.mxu0 0.0
    %603 = vmatprep.subr.mxu0 0.0
    %604 = vmatpush1.msra.mxu0 0.0
    %605 = vmatprep.subr.mxu0 0.0
    %606 = vmatpush1.msra.mxu0 0.0
    %607 = vmatprep.subr.mxu0 0.0
    %608 = vmatpush1.msra.mxu0 0.0
    %609 = vmatprep.subr.mxu0 0.0
    %610 = vmatpush1.msra.mxu0 0.0
    %611 = vmatprep.subr.mxu0 0.0
    %612 = vmatpush1.msra.mxu0 0.0
    %613 = vmatprep.subr.mxu0 0.0
    %614 = vmatpush1.msra.mxu0 0.0
    %615 = vmatprep.subr.mxu0 0.0
    %616 = vmatpush1.msra.mxu0 0.0
    %617 = vmatprep.subr.mxu0 0.0
    %618 = vmatpush1.msra.mxu0 0.0
    %619 = vmatprep.subr.mxu0 0.0
    %620 = vmatpush1.msra.mxu0 0.0
    %621 = vmatprep.subr.mxu0 0.0
    %622 = vmatpush1.msra.mxu0 0.0
    %623 = vmatprep.subr.mxu0 0.0
    %624 = vmatpush1.msra.mxu0 0.0
    %625 = vmatprep.subr.mxu0 0.0
    %626 = vmatpush1.msra.mxu0 0.0
    %627 = vmatprep.mubr.f32.mxu0 0.0
    %628 = vmatmul.mubr.f32.gmra.mrb[0].mxu0 %v558
    %v629 = vpop.f32.mrb[0].mxu0
    %v630 = vadd.f32 %v549, %v629
    %v631 = vpop.f32.mrb[0].mxu0
    %632 = vmatprep.mubr.f32.mxu0 0.0
    %633 = vmatmul.mubr.f32.gmra.mrb[0].mxu0 %v561
    %v634 = vpop.f32.mrb[0].mxu0
    %v635 = vadd.f32 %v554, %v634
    %v636 = vpop.f32.mrb[0].mxu0
    %637 = vdwg.mxu0
    %v638 = vld [vmem:[#allocation2 + $0x2] sm:$0xff]
    %v639 = vld [vmem:[#allocation2 + $0xa] sm:$0xff]
    %v641 = vsel %vm171, %v638, 0
    %v644 = vsel %vm171, %v639, 0
    %646 = vmatprep.subr.mxu0 0.0
    %647 = vmatpush1.msra.mxu0 %v454
    %648 = vmatprep.subr.mxu0 0.0
    %649 = vmatpush1.msra.mxu0 %v455
    %650 = vmatprep.subr.mxu0 0.0
    %651 = vmatpush1.msra.mxu0 %v456
    %652 = vmatprep.subr.mxu0 0.0
    %653 = vmatpush1.msra.mxu0 %v457
    %654 = vmatprep.subr.mxu0 0.0
    %655 = vmatpush1.msra.mxu0 %v458
    %656 = vmatprep.subr.mxu0 0.0
    %657 = vmatpush1.msra.mxu0 %v459
    %658 = vmatprep.subr.mxu0 0.0
    %659 = vmatpush1.msra.mxu0 %v460
    %660 = vmatprep.subr.mxu0 0.0
    %661 = vmatpush1.msra.mxu0 %v461
    %662 = vmatprep.subr.mxu0 0.0
    %663 = vmatpush1.msra.mxu0 0.0
    %664 = vmatprep.subr.mxu0 0.0
    %665 = vmatpush1.msra.mxu0 0.0
    %666 = vmatprep.subr.mxu0 0.0
    %667 = vmatpush1.msra.mxu0 0.0
    %668 = vmatprep.subr.mxu0 0.0
    %669 = vmatpush1.msra.mxu0 0.0
    %670 = vmatprep.subr.mxu0 0.0
    %671 = vmatpush1.msra.mxu0 0.0
    %672 = vmatprep.subr.mxu0 0.0
    %673 = vmatpush1.msra.mxu0 0.0
    %674 = vmatprep.subr.mxu0 0.0
    %675 = vmatpush1.msra.mxu0 0.0
    %676 = vmatprep.subr.mxu0 0.0
    %677 = vmatpush1.msra.mxu0 0.0
    %678 = vmatprep.subr.mxu0 0.0
    %679 = vmatpush1.msra.mxu0 0.0
    %680 = vmatprep.subr.mxu0 0.0
    %681 = vmatpush1.msra.mxu0 0.0
    %682 = vmatprep.subr.mxu0 0.0
    %683 = vmatpush1.msra.mxu0 0.0
    %684 = vmatprep.subr.mxu0 0.0
    %685 = vmatpush1.msra.mxu0 0.0
    %686 = vmatprep.subr.mxu0 0.0
    %687 = vmatpush1.msra.mxu0 0.0
    %688 = vmatprep.subr.mxu0 0.0
    %689 = vmatpush1.msra.mxu0 0.0
    %690 = vmatprep.subr.mxu0 0.0
    %691 = vmatpush1.msra.mxu0 0.0
    %692 = vmatprep.subr.mxu0 0.0
    %693 = vmatpush1.msra.mxu0 0.0
    %694 = vmatprep.subr.mxu0 0.0
    %695 = vmatpush1.msra.mxu0 0.0
    %696 = vmatprep.subr.mxu0 0.0
    %697 = vmatpush1.msra.mxu0 0.0
    %698 = vmatprep.subr.mxu0 0.0
    %699 = vmatpush1.msra.mxu0 0.0
    %700 = vmatprep.subr.mxu0 0.0
    %701 = vmatpush1.msra.mxu0 0.0
    %702 = vmatprep.subr.mxu0 0.0
    %703 = vmatpush1.msra.mxu0 0.0
    %704 = vmatprep.subr.mxu0 0.0
    %705 = vmatpush1.msra.mxu0 0.0
    %706 = vmatprep.subr.mxu0 0.0
    %707 = vmatpush1.msra.mxu0 0.0
    %708 = vmatprep.subr.mxu0 0.0
    %709 = vmatpush1.msra.mxu0 0.0
    %710 = vmatprep.mubr.f32.mxu0 0.0
    %711 = vmatmul.mubr.f32.gmra.mrb[0].mxu0 %v641
    %v712 = vpop.f32.mrb[0].mxu0
    %v713 = vadd.f32 0.0, %v712
    %v714 = vpop.f32.mrb[0].mxu0
    %715 = vmatprep.mubr.f32.mxu0 0.0
    %716 = vmatmul.mubr.f32.gmra.mrb[0].mxu0 %v644
    %v717 = vpop.f32.mrb[0].mxu0
    %v718 = vadd.f32 0.0, %v717
    %v719 = vpop.f32.mrb[0].mxu0
    %720 = vdwg.mxu0
    %v721 = vadd.f32 %v630, %v713
    %v722 = vadd.f32 %v635, %v718
    %v723 = vld [vmem:[%s9] sm:$0x1]
    %v725 = vlaneseq
    %v726 = vshrl.u32 %v725, 7
    %v727 = vsub.s32 0, %v726
    %v728 = vrot.slane %v723, %v727
    %v730 = vadd.f32 %v721, %v728
    %v731 = vadd.f32 %v722, %v728
    %732 = vst.msk [vmem:[#allocation3] sm:$0xff] %vm171, %v730
    %733 = vst.msk [vmem:[#allocation3 + $0x8] sm:$0xff] %vm171, %v731
    %v734 = vld [vmem:[#allocation2 + $0x12] sm:$0xff]
    %v735 = vld [vmem:[#allocation2 + $0x1a] sm:$0xff]
    %v736 = vld [vmem:[#allocation2 + $0x13] sm:$0xff]
    %v737 = vld [vmem:[#allocation2 + $0x1b] sm:$0xff]
    %v739 = vsel %vm171, %v736, 0
    %v742 = vsel %vm171, %v737, 0
    %744 = vmatprep.subr.mxu0 0.0
    %745 = vmatpush1.msra.mxu0 %v446
    %746 = vmatprep.subr.mxu0 0.0
    %747 = vmatpush1.msra.mxu0 %v447
    %748 = vmatprep.subr.mxu0 0.0
    %749 = vmatpush1.msra.mxu0 %v448
    %750 = vmatprep.subr.mxu0 0.0
    %751 = vmatpush1.msra.mxu0 %v449
    %752 = vmatprep.subr.mxu0 0.0
    %753 = vmatpush1.msra.mxu0 %v450
    %754 = vmatprep.subr.mxu0 0.0
    %755 = vmatpush1.msra.mxu0 %v451
    %756 = vmatprep.subr.mxu0 0.0
    %757 = vmatpush1.msra.mxu0 %v452
    %758 = vmatprep.subr.mxu0 0.0
    %759 = vmatpush1.msra.mxu0 %v453
    %760 = vmatprep.subr.mxu0 0.0
    %761 = vmatpush1.msra.mxu0 0.0
    %762 = vmatprep.subr.mxu0 0.0
    %763 = vmatpush1.msra.mxu0 0.0
    %764 = vmatprep.subr.mxu0 0.0
    %765 = vmatpush1.msra.mxu0 0.0
    %766 = vmatprep.subr.mxu0 0.0
    %767 = vmatpush1.msra.mxu0 0.0
    %768 = vmatprep.subr.mxu0 0.0
    %769 = vmatpush1.msra.mxu0 0.0
    %770 = vmatprep.subr.mxu0 0.0
    %771 = vmatpush1.msra.mxu0 0.0
    %772 = vmatprep.subr.mxu0 0.0
    %773 = vmatpush1.msra.mxu0 0.0
    %774 = vmatprep.subr.mxu0 0.0
    %775 = vmatpush1.msra.mxu0 0.0
    %776 = vmatprep.subr.mxu0 0.0
    %777 = vmatpush1.msra.mxu0 0.0
    %778 = vmatprep.subr.mxu0 0.0
    %779 = vmatpush1.msra.mxu0 0.0
    %780 = vmatprep.subr.mxu0 0.0
    %781 = vmatpush1.msra.mxu0 0.0
    %782 = vmatprep.subr.mxu0 0.0
    %783 = vmatpush1.msra.mxu0 0.0
    %784 = vmatprep.subr.mxu0 0.0
    %785 = vmatpush1.msra.mxu0 0.0
    %786 = vmatprep.subr.mxu0 0.0
    %787 = vmatpush1.msra.mxu0 0.0
    %788 = vmatprep.subr.mxu0 0.0
    %789 = vmatpush1.msra.mxu0 0.0
    %790 = vmatprep.subr.mxu0 0.0
    %791 = vmatpush1.msra.mxu0 0.0
    %792 = vmatprep.subr.mxu0 0.0
    %793 = vmatpush1.msra.mxu0 0.0
    %794 = vmatprep.subr.mxu0 0.0
    %795 = vmatpush1.msra.mxu0 0.0
    %796 = vmatprep.subr.mxu0 0.0
    %797 = vmatpush1.msra.mxu0 0.0
    %798 = vmatprep.subr.mxu0 0.0
    %799 = vmatpush1.msra.mxu0 0.0
    %800 = vmatprep.subr.mxu0 0.0
    %801 = vmatpush1.msra.mxu0 0.0
    %802 = vmatprep.subr.mxu0 0.0
    %803 = vmatpush1.msra.mxu0 0.0
    %804 = vmatprep.subr.mxu0 0.0
    %805 = vmatpush1.msra.mxu0 0.0
    %806 = vmatprep.subr.mxu0 0.0
    %807 = vmatpush1.msra.mxu0 0.0
    %808 = vmatprep.mubr.f32.mxu0 0.0
    %809 = vmatmul.mubr.f32.gmra.mrb[0].mxu0 %v739
    %v810 = vpop.f32.mrb[0].mxu0
    %v811 = vadd.f32 0.0, %v810
    %v812 = vpop.f32.mrb[0].mxu0
    %813 = vmatprep.mubr.f32.mxu0 0.0
    %814 = vmatmul.mubr.f32.gmra.mrb[0].mxu0 %v742
    %v815 = vpop.f32.mrb[0].mxu0
    %v816 = vadd.f32 0.0, %v815
    %v817 = vpop.f32.mrb[0].mxu0
    %818 = vdwg.mxu0
    %v820 = vsel %vm171, %v734, 0
    %v823 = vsel %vm171, %v735, 0
    %825 = vmatprep.subr.mxu0 0.0
    %826 = vmatpush1.msra.mxu0 %v438
    %827 = vmatprep.subr.mxu0 0.0
    %828 = vmatpush1.msra.mxu0 %v439
    %829 = vmatprep.subr.mxu0 0.0
    %830 = vmatpush1.msra.mxu0 %v440
    %831 = vmatprep.subr.mxu0 0.0
    %832 = vmatpush1.msra.mxu0 %v441
    %833 = vmatprep.subr.mxu0 0.0
    %834 = vmatpush1.msra.mxu0 %v442
    %835 = vmatprep.subr.mxu0 0.0
    %836 = vmatpush1.msra.mxu0 %v443
    %837 = vmatprep.subr.mxu0 0.0
    %838 = vmatpush1.msra.mxu0 %v444
    %839 = vmatprep.subr.mxu0 0.0
    %840 = vmatpush1.msra.mxu0 %v445
    %841 = vmatprep.subr.mxu0 0.0
    %842 = vmatpush1.msra.mxu0 0.0
    %843 = vmatprep.subr.mxu0 0.0
    %844 = vmatpush1.msra.mxu0 0.0
    %845 = vmatprep.subr.mxu0 0.0
    %846 = vmatpush1.msra.mxu0 0.0
    %847 = vmatprep.subr.mxu0 0.0
    %848 = vmatpush1.msra.mxu0 0.0
    %849 = vmatprep.subr.mxu0 0.0
    %850 = vmatpush1.msra.mxu0 0.0
    %851 = vmatprep.subr.mxu0 0.0
    %852 = vmatpush1.msra.mxu0 0.0
    %853 = vmatprep.subr.mxu0 0.0
    %854 = vmatpush1.msra.mxu0 0.0
    %855 = vmatprep.subr.mxu0 0.0
    %856 = vmatpush1.msra.mxu0 0.0
    %857 = vmatprep.subr.mxu0 0.0
    %858 = vmatpush1.msra.mxu0 0.0
    %859 = vmatprep.subr.mxu0 0.0
    %860 = vmatpush1.msra.mxu0 0.0
    %861 = vmatprep.subr.mxu0 0.0
    %862 = vmatpush1.msra.mxu0 0.0
    %863 = vmatprep.subr.mxu0 0.0
    %864 = vmatpush1.msra.mxu0 0.0
    %865 = vmatprep.subr.mxu0 0.0
    %866 = vmatpush1.msra.mxu0 0.0
    %867 = vmatprep.subr.mxu0 0.0
    %868 = vmatpush1.msra.mxu0 0.0
    %869 = vmatprep.subr.mxu0 0.0
    %870 = vmatpush1.msra.mxu0 0.0
    %871 = vmatprep.subr.mxu0 0.0
    %872 = vmatpush1.msra.mxu0 0.0
    %873 = vmatprep.subr.mxu0 0.0
    %874 = vmatpush1.msra.mxu0 0.0
    %875 = vmatprep.subr.mxu0 0.0
    %876 = vmatpush1.msra.mxu0 0.0
    %877 = vmatprep.subr.mxu0 0.0
    %878 = vmatpush1.msra.mxu0 0.0
    %879 = vmatprep.subr.mxu0 0.0
    %880 = vmatpush1.msra.mxu0 0.0
    %881 = vmatprep.subr.mxu0 0.0
    %882 = vmatpush1.msra.mxu0 0.0
    %883 = vmatprep.subr.mxu0 0.0
    %884 = vmatpush1.msra.mxu0 0.0
    %885 = vmatprep.subr.mxu0 0.0
    %886 = vmatpush1.msra.mxu0 0.0
    %887 = vmatprep.subr.mxu0 0.0
    %888 = vmatpush1.msra.mxu0 0.0
    %889 = vmatprep.mubr.f32.mxu0 0.0
    %890 = vmatmul.mubr.f32.gmra.mrb[0].mxu0 %v820
    %v891 = vpop.f32.mrb[0].mxu0
    %v892 = vadd.f32 %v811, %v891
    %v893 = vpop.f32.mrb[0].mxu0
    %894 = vmatprep.mubr.f32.mxu0 0.0
    %895 = vmatmul.mubr.f32.gmra.mrb[0].mxu0 %v823
    %v896 = vpop.f32.mrb[0].mxu0
    %v897 = vadd.f32 %v816, %v896
    %v898 = vpop.f32.mrb[0].mxu0
    %899 = vdwg.mxu0
    %v900 = vld [vmem:[#allocation2 + $0x14] sm:$0xff]
    %v901 = vld [vmem:[#allocation2 + $0x1c] sm:$0xff]
    %v903 = vsel %vm171, %v900, 0
    %v906 = vsel %vm171, %v901, 0
    %908 = vmatprep.subr.mxu0 0.0
    %909 = vmatpush1.msra.mxu0 %v454
    %910 = vmatprep.subr.mxu0 0.0
    %911 = vmatpush1.msra.mxu0 %v455
    %912 = vmatprep.subr.mxu0 0.0
    %913 = vmatpush1.msra.mxu0 %v456
    %914 = vmatprep.subr.mxu0 0.0
    %915 = vmatpush1.msra.mxu0 %v457
    %916 = vmatprep.subr.mxu0 0.0
    %917 = vmatpush1.msra.mxu0 %v458
    %918 = vmatprep.subr.mxu0 0.0
    %919 = vmatpush1.msra.mxu0 %v459
    %920 = vmatprep.subr.mxu0 0.0
    %921 = vmatpush1.msra.mxu0 %v460
    %922 = vmatprep.subr.mxu0 0.0
    %923 = vmatpush1.msra.mxu0 %v461
    %924 = vmatprep.subr.mxu0 0.0
    %925 = vmatpush1.msra.mxu0 0.0
    %926 = vmatprep.subr.mxu0 0.0
    %927 = vmatpush1.msra.mxu0 0.0
    %928 = vmatprep.subr.mxu0 0.0
    %929 = vmatpush1.msra.mxu0 0.0
    %930 = vmatprep.subr.mxu0 0.0
    %931 = vmatpush1.msra.mxu0 0.0
    %932 = vmatprep.subr.mxu0 0.0
    %933 = vmatpush1.msra.mxu0 0.0
    %934 = vmatprep.subr.mxu0 0.0
    %935 = vmatpush1.msra.mxu0 0.0
    %936 = vmatprep.subr.mxu0 0.0
    %937 = vmatpush1.msra.mxu0 0.0
    %938 = vmatprep.subr.mxu0 0.0
    %939 = vmatpush1.msra.mxu0 0.0
    %940 = vmatprep.subr.mxu0 0.0
    %941 = vmatpush1.msra.mxu0 0.0
    %942 = vmatprep.subr.mxu0 0.0
    %943 = vmatpush1.msra.mxu0 0.0
    %944 = vmatprep.subr.mxu0 0.0
    %945 = vmatpush1.msra.mxu0 0.0
    %946 = vmatprep.subr.mxu0 0.0
    %947 = vmatpush1.msra.mxu0 0.0
    %948 = vmatprep.subr.mxu0 0.0
    %949 = vmatpush1.msra.mxu0 0.0
    %950 = vmatprep.subr.mxu0 0.0
    %951 = vmatpush1.msra.mxu0 0.0
    %952 = vmatprep.subr.mxu0 0.0
    %953 = vmatpush1.msra.mxu0 0.0
    %954 = vmatprep.subr.mxu0 0.0
    %955 = vmatpush1.msra.mxu0 0.0
    %956 = vmatprep.subr.mxu0 0.0
    %957 = vmatpush1.msra.mxu0 0.0
    %958 = vmatprep.subr.mxu0 0.0
    %959 = vmatpush1.msra.mxu0 0.0
    %960 = vmatprep.subr.mxu0 0.0
    %961 = vmatpush1.msra.mxu0 0.0
    %962 = vmatprep.subr.mxu0 0.0
    %963 = vmatpush1.msra.mxu0 0.0
    %964 = vmatprep.subr.mxu0 0.0
    %965 = vmatpush1.msra.mxu0 0.0
    %966 = vmatprep.subr.mxu0 0.0
    %967 = vmatpush1.msra.mxu0 0.0
    %968 = vmatprep.subr.mxu0 0.0
    %969 = vmatpush1.msra.mxu0 0.0
    %970 = vmatprep.subr.mxu0 0.0
    %971 = vmatpush1.msra.mxu0 0.0
    %972 = vmatprep.mubr.f32.mxu0 0.0
    %973 = vmatmul.mubr.f32.gmra.mrb[0].mxu0 %v903
    %v974 = vpop.f32.mrb[0].mxu0
    %v975 = vadd.f32 0.0, %v974
    %v976 = vpop.f32.mrb[0].mxu0
    %977 = vmatprep.mubr.f32.mxu0 0.0
    %978 = vmatmul.mubr.f32.gmra.mrb[0].mxu0 %v906
    %v979 = vpop.f32.mrb[0].mxu0
    %v980 = vadd.f32 0.0, %v979
    %v981 = vpop.f32.mrb[0].mxu0
    %982 = vdwg.mxu0
    %v983 = vadd.f32 %v892, %v975
    %v984 = vadd.f32 %v897, %v980
    %v985 = vld [vmem:[%s9] sm:$0x1]
    %v987 = vlaneseq
    %v988 = vshrl.u32 %v987, 7
    %v989 = vsub.s32 0, %v988
    %v990 = vrot.slane %v985, %v989
    %v992 = vadd.f32 %v983, %v990
    %v993 = vadd.f32 %v984, %v990
    %994 = vst.msk [vmem:[#allocation3 + $0x10] sm:$0xff] %vm171, %v992
    %995 = vst.msk [vmem:[#allocation3 + $0x18] sm:$0xff] %vm171, %v993
    %v996 = vld [vmem:[#allocation3] sm:$0xff]
    %v997 = vld [vmem:[#allocation3 + $0x8] sm:$0xff]
    %v998 = vld [vmem:[#allocation3 + $0x10] sm:$0xff]
    %v999 = vld [vmem:[#allocation3 + $0x18] sm:$0xff]
    %v1000 = vld [vmem:[#allocation7] sm:$0xff]
    %v1001 = vld [vmem:[#allocation7 + $0x8] sm:$0xff]
    %v1002 = vld [vmem:[#allocation7 + $0x10] sm:$0xff]
    %v1003 = vld [vmem:[#allocation7 + $0x18] sm:$0xff]
    %v1004 = vld [vmem:[#allocation7 + $0x20] sm:$0xff]
    %v1005 = vld [vmem:[#allocation7 + $0x28] sm:$0xff]
    %v1006 = vld [vmem:[#allocation7 + $0x30] sm:$0xff]
    %v1007 = vld [vmem:[#allocation7 + $0x38] sm:$0xff]
    %v1008 = vld [vmem:[%s4] sm:$0x1]
    %v1009 = vld [vmem:[%s5] sm:$0x1]
    %v1011 = vsel %vm171, %v996, 0
    %v1014 = vsel %vm171, %v997, 0
    %v1017 = vsel %vm171, %v998, 0
    %v1020 = vsel %vm171, %v999, 0
    %1022 = vmatprep.subr.mxu0 0.0
    %1023 = vmatpush1.msra.mxu0 %v1000
    %1024 = vmatprep.subr.mxu0 0.0
    %1025 = vmatpush1.msra.mxu0 %v1001
    %1026 = vmatprep.subr.mxu0 0.0
    %1027 = vmatpush1.msra.mxu0 %v1002
    %1028 = vmatprep.subr.mxu0 0.0
    %1029 = vmatpush1.msra.mxu0 %v1003
    %1030 = vmatprep.subr.mxu0 0.0
    %1031 = vmatpush1.msra.mxu0 %v1004
    %1032 = vmatprep.subr.mxu0 0.0
    %1033 = vmatpush1.msra.mxu0 %v1005
    %1034 = vmatprep.subr.mxu0 0.0
    %1035 = vmatpush1.msra.mxu0 %v1006
    %1036 = vmatprep.subr.mxu0 0.0
    %1037 = vmatpush1.msra.mxu0 %v1007
    %1038 = vmatprep.subr.mxu0 0.0
    %1039 = vmatpush1.msra.mxu0 0.0
    %1040 = vmatprep.subr.mxu0 0.0
    %1041 = vmatpush1.msra.mxu0 0.0
    %1042 = vmatprep.subr.mxu0 0.0
    %1043 = vmatpush1.msra.mxu0 0.0
    %1044 = vmatprep.subr.mxu0 0.0
    %1045 = vmatpush1.msra.mxu0 0.0
    %1046 = vmatprep.subr.mxu0 0.0
    %1047 = vmatpush1.msra.mxu0 0.0
    %1048 = vmatprep.subr.mxu0 0.0
    %1049 = vmatpush1.msra.mxu0 0.0
    %1050 = vmatprep.subr.mxu0 0.0
    %1051 = vmatpush1.msra.mxu0 0.0
    %1052 = vmatprep.subr.mxu0 0.0
    %1053 = vmatpush1.msra.mxu0 0.0
    %1054 = vmatprep.subr.mxu0 0.0
    %1055 = vmatpush1.msra.mxu0 0.0
    %1056 = vmatprep.subr.mxu0 0.0
    %1057 = vmatpush1.msra.mxu0 0.0
    %1058 = vmatprep.subr.mxu0 0.0
    %1059 = vmatpush1.msra.mxu0 0.0
    %1060 = vmatprep.subr.mxu0 0.0
    %1061 = vmatpush1.msra.mxu0 0.0
    %1062 = vmatprep.subr.mxu0 0.0
    %1063 = vmatpush1.msra.mxu0 0.0
    %1064 = vmatprep.subr.mxu0 0.0
    %1065 = vmatpush1.msra.mxu0 0.0
    %1066 = vmatprep.subr.mxu0 0.0
    %1067 = vmatpush1.msra.mxu0 0.0
    %1068 = vmatprep.subr.mxu0 0.0
    %1069 = vmatpush1.msra.mxu0 0.0
    %1070 = vmatprep.subr.mxu0 0.0
    %1071 = vmatpush1.msra.mxu0 0.0
    %1072 = vmatprep.subr.mxu0 0.0
    %1073 = vmatpush1.msra.mxu0 0.0
    %1074 = vmatprep.subr.mxu0 0.0
    %1075 = vmatpush1.msra.mxu0 0.0
    %1076 = vmatprep.subr.mxu0 0.0
    %1077 = vmatpush1.msra.mxu0 0.0
    %1078 = vmatprep.subr.mxu0 0.0
    %1079 = vmatpush1.msra.mxu0 0.0
    %1080 = vmatprep.subr.mxu0 0.0
    %1081 = vmatpush1.msra.mxu0 0.0
    %1082 = vmatprep.subr.mxu0 0.0
    %1083 = vmatpush1.msra.mxu0 0.0
    %1084 = vmatprep.subr.mxu0 0.0
    %1085 = vmatpush1.msra.mxu0 0.0
    %1086 = vmatprep.mubr.f32.mxu0 0.0
    %1087 = vmatmul.mubr.f32.gmra.mrb[0].mxu0 %v1011
    %v1088 = vpop.f32.mrb[0].mxu0
    %v1089 = vadd.f32 0.0, %v1088
    %v1090 = vpop.f32.mrb[0].mxu0
    %1091 = vmatprep.mubr.f32.mxu0 0.0
    %1092 = vmatmul.mubr.f32.gmra.mrb[0].mxu0 %v1014
    %v1093 = vpop.f32.mrb[0].mxu0
    %v1094 = vadd.f32 0.0, %v1093
    %v1095 = vpop.f32.mrb[0].mxu0
    %1096 = vmatprep.mubr.f32.mxu0 0.0
    %1097 = vmatmul.mubr.f32.gmra.mrb[0].mxu0 %v1017
    %v1098 = vpop.f32.mrb[0].mxu0
    %v1099 = vadd.f32 0.0, %v1098
    %v1100 = vpop.f32.mrb[0].mxu0
    %1101 = vmatprep.mubr.f32.mxu0 0.0
    %1102 = vmatmul.mubr.f32.gmra.mrb[0].mxu0 %v1020
    %v1103 = vpop.f32.mrb[0].mxu0
    %v1104 = vadd.f32 0.0, %v1103
    %v1105 = vpop.f32.mrb[0].mxu0
    %1106 = vdwg.mxu0
    %v1107 = vsel %vm171, %v1089, 0.0
    %v1108 = vsel %vm171, %v1094, 0.0
    %v1109 = vadd.f32 %v1107, %v1108
    %v1110 = vsel %vm171, %v1099, 0.0
    %v1111 = vadd.f32 %v1109, %v1110
    %v1112 = vsel %vm171, %v1104, 0.0
    %v1113 = vadd.f32 %v1111, %v1112
    %v1114 = vrot.slane %v1113, 4
    %v1115 = vadd.f32 %v1113, %v1114
    %v1116 = vrot.slane %v1115, 2
    %v1117 = vadd.f32 %v1115, %v1116
    %v1118 = vrot.slane %v1117, 1
    %v1119 = vadd.f32 %v1117, %v1118
    %v1120 = vmul.f32 %v1119, 0.001953125
    %v1121 = vsub.f32 %v996, %v1120
    %v1122 = vsub.f32 %v997, %v1120
    %v1123 = vsub.f32 %v998, %v1120
    %v1124 = vsub.f32 %v999, %v1120
    %v1125 = vmul.f32 %v1121, %v1121
    %v1126 = vmul.f32 %v1122, %v1122
    %v1127 = vmul.f32 %v1123, %v1123
    %v1128 = vmul.f32 %v1124, %v1124
    %v1130 = vsel %vm171, %v1125, 0
    %v1133 = vsel %vm171, %v1126, 0
    %v1136 = vsel %vm171, %v1127, 0
    %v1139 = vsel %vm171, %v1128, 0
    %1141 = vmatprep.subr.mxu0 0.0
    %1142 = vmatpush1.msra.mxu0 %v1000
    %1143 = vmatprep.subr.mxu0 0.0
    %1144 = vmatpush1.msra.mxu0 %v1001
    %1145 = vmatprep.subr.mxu0 0.0
    %1146 = vmatpush1.msra.mxu0 %v1002
    %1147 = vmatprep.subr.mxu0 0.0
    %1148 = vmatpush1.msra.mxu0 %v1003
    %1149 = vmatprep.subr.mxu0 0.0
    %1150 = vmatpush1.msra.mxu0 %v1004
    %1151 = vmatprep.subr.mxu0 0.0
    %1152 = vmatpush1.msra.mxu0 %v1005
    %1153 = vmatprep.subr.mxu0 0.0
    %1154 = vmatpush1.msra.mxu0 %v1006
    %1155 = vmatprep.subr.mxu0 0.0
    %1156 = vmatpush1.msra.mxu0 %v1007
    %1157 = vmatprep.subr.mxu0 0.0
    %1158 = vmatpush1.msra.mxu0 0.0
    %1159 = vmatprep.subr.mxu0 0.0
    %1160 = vmatpush1.msra.mxu0 0.0
    %1161 = vmatprep.subr.mxu0 0.0
    %1162 = vmatpush1.msra.mxu0 0.0
    %1163 = vmatprep.subr.mxu0 0.0
    %1164 = vmatpush1.msra.mxu0 0.0
    %1165 = vmatprep.subr.mxu0 0.0
    %1166 = vmatpush1.msra.mxu0 0.0
    %1167 = vmatprep.subr.mxu0 0.0
    %1168 = vmatpush1.msra.mxu0 0.0
    %1169 = vmatprep.subr.mxu0 0.0
    %1170 = vmatpush1.msra.mxu0 0.0
    %1171 = vmatprep.subr.mxu0 0.0
    %1172 = vmatpush1.msra.mxu0 0.0
    %1173 = vmatprep.subr.mxu0 0.0
    %1174 = vmatpush1.msra.mxu0 0.0
    %1175 = vmatprep.subr.mxu0 0.0
    %1176 = vmatpush1.msra.mxu0 0.0
    %1177 = vmatprep.subr.mxu0 0.0
    %1178 = vmatpush1.msra.mxu0 0.0
    %1179 = vmatprep.subr.mxu0 0.0
    %1180 = vmatpush1.msra.mxu0 0.0
    %1181 = vmatprep.subr.mxu0 0.0
    %1182 = vmatpush1.msra.mxu0 0.0
    %1183 = vmatprep.subr.mxu0 0.0
    %1184 = vmatpush1.msra.mxu0 0.0
    %1185 = vmatprep.subr.mxu0 0.0
    %1186 = vmatpush1.msra.mxu0 0.0
    %1187 = vmatprep.subr.mxu0 0.0
    %1188 = vmatpush1.msra.mxu0 0.0
    %1189 = vmatprep.subr.mxu0 0.0
    %1190 = vmatpush1.msra.mxu0 0.0
    %1191 = vmatprep.subr.mxu0 0.0
    %1192 = vmatpush1.msra.mxu0 0.0
    %1193 = vmatprep.subr.mxu0 0.0
    %1194 = vmatpush1.msra.mxu0 0.0
    %1195 = vmatprep.subr.mxu0 0.0
    %1196 = vmatpush1.msra.mxu0 0.0
    %1197 = vmatprep.subr.mxu0 0.0
    %1198 = vmatpush1.msra.mxu0 0.0
    %1199 = vmatprep.subr.mxu0 0.0
    %1200 = vmatpush1.msra.mxu0 0.0
    %1201 = vmatprep.subr.mxu0 0.0
    %1202 = vmatpush1.msra.mxu0 0.0
    %1203 = vmatprep.subr.mxu0 0.0
    %1204 = vmatpush1.msra.mxu0 0.0
    %1205 = vmatprep.mubr.f32.mxu0 0.0
    %1206 = vmatmul.mubr.f32.gmra.mrb[0].mxu0 %v1130
    %v1207 = vpop.f32.mrb[0].mxu0
    %v1208 = vadd.f32 0.0, %v1207
    %v1209 = vpop.f32.mrb[0].mxu0
    %1210 = vmatprep.mubr.f32.mxu0 0.0
    %1211 = vmatmul.mubr.f32.gmra.mrb[0].mxu0 %v1133
    %v1212 = vpop.f32.mrb[0].mxu0
    %v1213 = vadd.f32 0.0, %v1212
    %v1214 = vpop.f32.mrb[0].mxu0
    %1215 = vmatprep.mubr.f32.mxu0 0.0
    %1216 = vmatmul.mubr.f32.gmra.mrb[0].mxu0 %v1136
    %v1217 = vpop.f32.mrb[0].mxu0
    %v1218 = vadd.f32 0.0, %v1217
    %v1219 = vpop.f32.mrb[0].mxu0
    %1220 = vmatprep.mubr.f32.mxu0 0.0
    %1221 = vmatmul.mubr.f32.gmra.mrb[0].mxu0 %v1139
    %v1222 = vpop.f32.mrb[0].mxu0
    %v1223 = vadd.f32 0.0, %v1222
    %v1224 = vpop.f32.mrb[0].mxu0
    %1225 = vdwg.mxu0
    %v1226 = vsel %vm171, %v1208, 0.0
    %v1227 = vsel %vm171, %v1213, 0.0
    %v1228 = vadd.f32 %v1226, %v1227
    %v1229 = vsel %vm171, %v1218, 0.0
    %v1230 = vadd.f32 %v1228, %v1229
    %v1231 = vsel %vm171, %v1223, 0.0
    %v1232 = vadd.f32 %v1230, %v1231
    %v1233 = vrot.slane %v1232, 4
    %v1234 = vadd.f32 %v1232, %v1233
    %v1235 = vrot.slane %v1234, 2
    %v1236 = vadd.f32 %v1234, %v1235
    %v1237 = vrot.slane %v1236, 1
    %v1238 = vadd.f32 %v1236, %v1237
    %v1239 = vmul.f32 %v1238, 0.001953125
    %v1240 = vadd.f32 %v1239, 1e-05
    %v1241 = vrsqrt.pop %v1240
    %v1242 = vmul.f32 %v1240, %v1241
    %vm1243 = vcmp.eq.f32.partialorder %v1240, inf
    %v1244 = vsel %vm1243, %v1240, %v1242
    %vm1245 = vcmp.eq.f32.partialorder %v1240, 0.0
    %v1246 = vand.u32 %v1240, 2147483648
    %v1247 = vsel %vm1245, %v1246, %v1244
    %v1248 = vrcp.pop %v1247
    %v1249 = vmul.f32 %v1008, %v1248
    %v1250 = vmul.f32 %v1120, %v1249
    %v1251 = vsub.f32 %v1009, %v1250
    %v1253 = vlaneseq
    %v1254 = vshrl.u32 %v1253, 7
    %v1255 = vsub.s32 0, %v1254
    %v1256 = vrot.slane %v1249, %v1255
    %v1258 = vmul.f32 %v996, %v1256
    %v1259 = vmul.f32 %v997, %v1256
    %v1260 = vmul.f32 %v998, %v1256
    %v1261 = vmul.f32 %v999, %v1256
    %v1263 = vlaneseq
    %v1264 = vshrl.u32 %v1263, 7
    %v1265 = vsub.s32 0, %v1264
    %v1266 = vrot.slane %v1251, %v1265
    %v1268 = vadd.f32 %v1258, %v1266
    %v1269 = vadd.f32 %v1259, %v1266
    %v1270 = vadd.f32 %v1260, %v1266
    %v1271 = vadd.f32 %v1261, %v1266
    %v1272 = vmax.f32 %v1268, 0.0
    %v1273 = vmax.f32 %v1269, 0.0
    %v1274 = vmax.f32 %v1270, 0.0
    %v1275 = vmax.f32 %v1271, 0.0
    %v1276 = vld [vmem:[#allocation13] sm:$0xff]
    %v1277 = vld [vmem:[#allocation13 + $0x8] sm:$0xff]
    %v1278 = vld [vmem:[#allocation13 + $0x10] sm:$0xff]
    %v1279 = vld [vmem:[#allocation13 + $0x18] sm:$0xff]
    %v1280 = vld [vmem:[#allocation13 + $0x20] sm:$0xff]
    %v1281 = vld [vmem:[#allocation13 + $0x28] sm:$0xff]
    %v1282 = vld [vmem:[#allocation13 + $0x30] sm:$0xff]
    %v1283 = vld [vmem:[#allocation13 + $0x38] sm:$0xff]
    %v1284 = vld [vmem:[#allocation15] sm:$0xff]
    %v1285 = vld [vmem:[#allocation15 + $0x8] sm:$0xff]
    %v1286 = vld [vmem:[#allocation15 + $0x10] sm:$0xff]
    %v1287 = vld [vmem:[#allocation15 + $0x18] sm:$0xff]
    %v1288 = vld [vmem:[#allocation15 + $0x20] sm:$0xff]
    %v1289 = vld [vmem:[#allocation15 + $0x28] sm:$0xff]
    %v1290 = vld [vmem:[#allocation15 + $0x30] sm:$0xff]
    %v1291 = vld [vmem:[#allocation15 + $0x38] sm:$0xff]
    %v1292 = vld [vmem:[#allocation16] sm:$0xff]
    %v1293 = vld [vmem:[#allocation16 + $0x8] sm:$0xff]
    %v1294 = vld [vmem:[#allocation16 + $0x10] sm:$0xff]
    %v1295 = vld [vmem:[#allocation16 + $0x18] sm:$0xff]
    %v1296 = vld [vmem:[#allocation16 + $0x20] sm:$0xff]
    %v1297 = vld [vmem:[#allocation16 + $0x28] sm:$0xff]
    %v1298 = vld [vmem:[#allocation16 + $0x30] sm:$0xff]
    %v1299 = vld [vmem:[#allocation16 + $0x38] sm:$0xff]
    %1300 = vst.msk [vmem:[#allocation2] sm:$0xff] %vm171, 0.0
    %1301 = vst.msk [vmem:[#allocation2 + $0x8] sm:$0xff] %vm171, 0.0
    %1302 = vst.msk [vmem:[#allocation2 + $0x10] sm:$0xff] %vm171, 0.0
    %1303 = vst.msk [vmem:[#allocation2 + $0x18] sm:$0xff] %vm171, 0.0
    %1304 = vst.msk [vmem:[#allocation2 + $0x20] sm:$0xf] %vm466, 0.0
    %1305 = vst.msk [vmem:[#allocation2 + $0x1] sm:$0xff] %vm171, %v1272
    %1306 = vst.msk [vmem:[#allocation2 + $0x9] sm:$0xff] %vm171, %v1273
    %1307 = vst.msk [vmem:[#allocation2 + $0x13] sm:$0xff] %vm171, %v1274
    %1308 = vst.msk [vmem:[#allocation2 + $0x1b] sm:$0xff] %vm171, %v1275
    %v1309 = vld [vmem:[#allocation2] sm:$0xff]
    %v1310 = vld [vmem:[#allocation2 + $0x8] sm:$0xff]
    %v1311 = vld [vmem:[#allocation2 + $0x1] sm:$0xff]
    %v1312 = vld [vmem:[#allocation2 + $0x9] sm:$0xff]
    %v1314 = vsel %vm171, %v1311, 0
    %v1317 = vsel %vm171, %v1312, 0
    %1319 = vmatprep.subr.mxu0 0.0
    %1320 = vmatpush1.msra.mxu0 %v1284
    %1321 = vmatprep.subr.mxu0 0.0
    %1322 = vmatpush1.msra.mxu0 %v1285
    %1323 = vmatprep.subr.mxu0 0.0
    %1324 = vmatpush1.msra.mxu0 %v1286
    %1325 = vmatprep.subr.mxu0 0.0
    %1326 = vmatpush1.msra.mxu0 %v1287
    %1327 = vmatprep.subr.mxu0 0.0
    %1328 = vmatpush1.msra.mxu0 %v1288
    %1329 = vmatprep.subr.mxu0 0.0
    %1330 = vmatpush1.msra.mxu0 %v1289
    %1331 = vmatprep.subr.mxu0 0.0
    %1332 = vmatpush1.msra.mxu0 %v1290
    %1333 = vmatprep.subr.mxu0 0.0
    %1334 = vmatpush1.msra.mxu0 %v1291
    %1335 = vmatprep.subr.mxu0 0.0
    %1336 = vmatpush1.msra.mxu0 0.0
    %1337 = vmatprep.subr.mxu0 0.0
    %1338 = vmatpush1.msra.mxu0 0.0
    %1339 = vmatprep.subr.mxu0 0.0
    %1340 = vmatpush1.msra.mxu0 0.0
    %1341 = vmatprep.subr.mxu0 0.0
    %1342 = vmatpush1.msra.mxu0 0.0
    %1343 = vmatprep.subr.mxu0 0.0
    %1344 = vmatpush1.msra.mxu0 0.0
    %1345 = vmatprep.subr.mxu0 0.0
    %1346 = vmatpush1.msra.mxu0 0.0
    %1347 = vmatprep.subr.mxu0 0.0
    %1348 = vmatpush1.msra.mxu0 0.0
    %1349 = vmatprep.subr.mxu0 0.0
    %1350 = vmatpush1.msra.mxu0 0.0
    %1351 = vmatprep.subr.mxu0 0.0
    %1352 = vmatpush1.msra.mxu0 0.0
    %1353 = vmatprep.subr.mxu0 0.0
    %1354 = vmatpush1.msra.mxu0 0.0
    %1355 = vmatprep.subr.mxu0 0.0
    %1356 = vmatpush1.msra.mxu0 0.0
    %1357 = vmatprep.subr.mxu0 0.0
    %1358 = vmatpush1.msra.mxu0 0.0
    %1359 = vmatprep.subr.mxu0 0.0
    %1360 = vmatpush1.msra.mxu0 0.0
    %1361 = vmatprep.subr.mxu0 0.0
    %1362 = vmatpush1.msra.mxu0 0.0
    %1363 = vmatprep.subr.mxu0 0.0
    %1364 = vmatpush1.msra.mxu0 0.0
    %1365 = vmatprep.subr.mxu0 0.0
    %1366 = vmatpush1.msra.mxu0 0.0
    %1367 = vmatprep.subr.mxu0 0.0
    %1368 = vmatpush1.msra.mxu0 0.0
    %1369 = vmatprep.subr.mxu0 0.0
    %1370 = vmatpush1.msra.mxu0 0.0
    %1371 = vmatprep.subr.mxu0 0.0
    %1372 = vmatpush1.msra.mxu0 0.0
    %1373 = vmatprep.subr.mxu0 0.0
    %1374 = vmatpush1.msra.mxu0 0.0
    %1375 = vmatprep.subr.mxu0 0.0
    %1376 = vmatpush1.msra.mxu0 0.0
    %1377 = vmatprep.subr.mxu0 0.0
    %1378 = vmatpush1.msra.mxu0 0.0
    %1379 = vmatprep.subr.mxu0 0.0
    %1380 = vmatpush1.msra.mxu0 0.0
    %1381 = vmatprep.subr.mxu0 0.0
    %1382 = vmatpush1.msra.mxu0 0.0
    %1383 = vmatprep.mubr.f32.mxu0 0.0
    %1384 = vmatmul.mubr.f32.gmra.mrb[0].mxu0 %v1314
    %v1385 = vpop.f32.mrb[0].mxu0
    %v1386 = vadd.f32 0.0, %v1385
    %v1387 = vpop.f32.mrb[0].mxu0
    %1388 = vmatprep.mubr.f32.mxu0 0.0
    %1389 = vmatmul.mubr.f32.gmra.mrb[0].mxu0 %v1317
    %v1390 = vpop.f32.mrb[0].mxu0
    %v1391 = vadd.f32 0.0, %v1390
    %v1392 = vpop.f32.mrb[0].mxu0
    %1393 = vdwg.mxu0
    %v1395 = vsel %vm171, %v1309, 0
    %v1398 = vsel %vm171, %v1310, 0
    %1400 = vmatprep.subr.mxu0 0.0
    %1401 = vmatpush1.msra.mxu0 %v1276
    %1402 = vmatprep.subr.mxu0 0.0
    %1403 = vmatpush1.msra.mxu0 %v1277
    %1404 = vmatprep.subr.mxu0 0.0
    %1405 = vmatpush1.msra.mxu0 %v1278
    %1406 = vmatprep.subr.mxu0 0.0
    %1407 = vmatpush1.msra.mxu0 %v1279
    %1408 = vmatprep.subr.mxu0 0.0
    %1409 = vmatpush1.msra.mxu0 %v1280
    %1410 = vmatprep.subr.mxu0 0.0
    %1411 = vmatpush1.msra.mxu0 %v1281
    %1412 = vmatprep.subr.mxu0 0.0
    %1413 = vmatpush1.msra.mxu0 %v1282
    %1414 = vmatprep.subr.mxu0 0.0
    %1415 = vmatpush1.msra.mxu0 %v1283
    %1416 = vmatprep.subr.mxu0 0.0
    %1417 = vmatpush1.msra.mxu0 0.0
    %1418 = vmatprep.subr.mxu0 0.0
    %1419 = vmatpush1.msra.mxu0 0.0
    %1420 = vmatprep.subr.mxu0 0.0
    %1421 = vmatpush1.msra.mxu0 0.0
    %1422 = vmatprep.subr.mxu0 0.0
    %1423 = vmatpush1.msra.mxu0 0.0
    %1424 = vmatprep.subr.mxu0 0.0
    %1425 = vmatpush1.msra.mxu0 0.0
    %1426 = vmatprep.subr.mxu0 0.0
    %1427 = vmatpush1.msra.mxu0 0.0
    %1428 = vmatprep.subr.mxu0 0.0
    %1429 = vmatpush1.msra.mxu0 0.0
    %1430 = vmatprep.subr.mxu0 0.0
    %1431 = vmatpush1.msra.mxu0 0.0
    %1432 = vmatprep.subr.mxu0 0.0
    %1433 = vmatpush1.msra.mxu0 0.0
    %1434 = vmatprep.subr.mxu0 0.0
    %1435 = vmatpush1.msra.mxu0 0.0
    %1436 = vmatprep.subr.mxu0 0.0
    %1437 = vmatpush1.msra.mxu0 0.0
    %1438 = vmatprep.subr.mxu0 0.0
    %1439 = vmatpush1.msra.mxu0 0.0
    %1440 = vmatprep.subr.mxu0 0.0
    %1441 = vmatpush1.msra.mxu0 0.0
    %1442 = vmatprep.subr.mxu0 0.0
    %1443 = vmatpush1.msra.mxu0 0.0
    %1444 = vmatprep.subr.mxu0 0.0
    %1445 = vmatpush1.msra.mxu0 0.0
    %1446 = vmatprep.subr.mxu0 0.0
    %1447 = vmatpush1.msra.mxu0 0.0
    %1448 = vmatprep.subr.mxu0 0.0
    %1449 = vmatpush1.msra.mxu0 0.0
    %1450 = vmatprep.subr.mxu0 0.0
    %1451 = vmatpush1.msra.mxu0 0.0
    %1452 = vmatprep.subr.mxu0 0.0
    %1453 = vmatpush1.msra.mxu0 0.0
    %1454 = vmatprep.subr.mxu0 0.0
    %1455 = vmatpush1.msra.mxu0 0.0
    %1456 = vmatprep.subr.mxu0 0.0
    %1457 = vmatpush1.msra.mxu0 0.0
    %1458 = vmatprep.subr.mxu0 0.0
    %1459 = vmatpush1.msra.mxu0 0.0
    %1460 = vmatprep.subr.mxu0 0.0
    %1461 = vmatpush1.msra.mxu0 0.0
    %1462 = vmatprep.subr.mxu0 0.0
    %1463 = vmatpush1.msra.mxu0 0.0
    %1464 = vmatprep.mubr.f32.mxu0 0.0
    %1465 = vmatmul.mubr.f32.gmra.mrb[0].mxu0 %v1395
    %v1466 = vpop.f32.mrb[0].mxu0
    %v1467 = vadd.f32 %v1386, %v1466
    %v1468 = vpop.f32.mrb[0].mxu0
    %1469 = vmatprep.mubr.f32.mxu0 0.0
    %1470 = vmatmul.mubr.f32.gmra.mrb[0].mxu0 %v1398
    %v1471 = vpop.f32.mrb[0].mxu0
    %v1472 = vadd.f32 %v1391, %v1471
    %v1473 = vpop.f32.mrb[0].mxu0
    %1474 = vdwg.mxu0
    %v1475 = vld [vmem:[#allocation2 + $0x2] sm:$0xff]
    %v1476 = vld [vmem:[#allocation2 + $0xa] sm:$0xff]
    %v1478 = vsel %vm171, %v1475, 0
    %v1481 = vsel %vm171, %v1476, 0
    %1483 = vmatprep.subr.mxu0 0.0
    %1484 = vmatpush1.msra.mxu0 %v1292
    %1485 = vmatprep.subr.mxu0 0.0
    %1486 = vmatpush1.msra.mxu0 %v1293
    %1487 = vmatprep.subr.mxu0 0.0
    %1488 = vmatpush1.msra.mxu0 %v1294
    %1489 = vmatprep.subr.mxu0 0.0
    %1490 = vmatpush1.msra.mxu0 %v1295
    %1491 = vmatprep.subr.mxu0 0.0
    %1492 = vmatpush1.msra.mxu0 %v1296
    %1493 = vmatprep.subr.mxu0 0.0
    %1494 = vmatpush1.msra.mxu0 %v1297
    %1495 = vmatprep.subr.mxu0 0.0
    %1496 = vmatpush1.msra.mxu0 %v1298
    %1497 = vmatprep.subr.mxu0 0.0
    %1498 = vmatpush1.msra.mxu0 %v1299
    %1499 = vmatprep.subr.mxu0 0.0
    %1500 = vmatpush1.msra.mxu0 0.0
    %1501 = vmatprep.subr.mxu0 0.0
    %1502 = vmatpush1.msra.mxu0 0.0
    %1503 = vmatprep.subr.mxu0 0.0
    %1504 = vmatpush1.msra.mxu0 0.0
    %1505 = vmatprep.subr.mxu0 0.0
    %1506 = vmatpush1.msra.mxu0 0.0
    %1507 = vmatprep.subr.mxu0 0.0
    %1508 = vmatpush1.msra.mxu0 0.0
    %1509 = vmatprep.subr.mxu0 0.0
    %1510 = vmatpush1.msra.mxu0 0.0
    %1511 = vmatprep.subr.mxu0 0.0
    %1512 = vmatpush1.msra.mxu0 0.0
    %1513 = vmatprep.subr.mxu0 0.0
    %1514 = vmatpush1.msra.mxu0 0.0
    %1515 = vmatprep.subr.mxu0 0.0
    %1516 = vmatpush1.msra.mxu0 0.0
    %1517 = vmatprep.subr.mxu0 0.0
    %1518 = vmatpush1.msra.mxu0 0.0
    %1519 = vmatprep.subr.mxu0 0.0
    %1520 = vmatpush1.msra.mxu0 0.0
    %1521 = vmatprep.subr.mxu0 0.0
    %1522 = vmatpush1.msra.mxu0 0.0
    %1523 = vmatprep.subr.mxu0 0.0
    %1524 = vmatpush1.msra.mxu0 0.0
    %1525 = vmatprep.subr.mxu0 0.0
    %1526 = vmatpush1.msra.mxu0 0.0
    %1527 = vmatprep.subr.mxu0 0.0
    %1528 = vmatpush1.msra.mxu0 0.0
    %1529 = vmatprep.subr.mxu0 0.0
    %1530 = vmatpush1.msra.mxu0 0.0
    %1531 = vmatprep.subr.mxu0 0.0
    %1532 = vmatpush1.msra.mxu0 0.0
    %1533 = vmatprep.subr.mxu0 0.0
    %1534 = vmatpush1.msra.mxu0 0.0
    %1535 = vmatprep.subr.mxu0 0.0
    %1536 = vmatpush1.msra.mxu0 0.0
    %1537 = vmatprep.subr.mxu0 0.0
    %1538 = vmatpush1.msra.mxu0 0.0
    %1539 = vmatprep.subr.mxu0 0.0
    %1540 = vmatpush1.msra.mxu0 0.0
    %1541 = vmatprep.subr.mxu0 0.0
    %1542 = vmatpush1.msra.mxu0 0.0
    %1543 = vmatprep.subr.mxu0 0.0
    %1544 = vmatpush1.msra.mxu0 0.0
    %1545 = vmatprep.subr.mxu0 0.0
    %1546 = vmatpush1.msra.mxu0 0.0
    %1547 = vmatprep.mubr.f32.mxu0 0.0
    %1548 = vmatmul.mubr.f32.gmra.mrb[0].mxu0 %v1478
    %v1549 = vpop.f32.mrb[0].mxu0
    %v1550 = vadd.f32 0.0, %v1549
    %v1551 = vpop.f32.mrb[0].mxu0
    %1552 = vmatprep.mubr.f32.mxu0 0.0
    %1553 = vmatmul.mubr.f32.gmra.mrb[0].mxu0 %v1481
    %v1554 = vpop.f32.mrb[0].mxu0
    %v1555 = vadd.f32 0.0, %v1554
    %v1556 = vpop.f32.mrb[0].mxu0
    %1557 = vdwg.mxu0
    %v1558 = vadd.f32 %v1467, %v1550
    %v1559 = vadd.f32 %v1472, %v1555
    %v1560 = vld [vmem:[%s13] sm:$0x1]
    %v1562 = vlaneseq
    %v1563 = vshrl.u32 %v1562, 7
    %v1564 = vsub.s32 0, %v1563
    %v1565 = vrot.slane %v1560, %v1564
    %v1567 = vadd.f32 %v1558, %v1565
    %v1568 = vadd.f32 %v1559, %v1565
    %v1569 = vadd.f32 %v1567, %v157
    %v1570 = vadd.f32 %v1568, %v158
    %1571 = vst.msk [vmem:[#allocation18] sm:$0xff] %vm171, %v1569
    %1572 = vst.msk [vmem:[#allocation18 + $0x8] sm:$0xff] %vm171, %v1570
    %v1573 = vld [vmem:[#allocation2 + $0x12] sm:$0xff]
    %v1574 = vld [vmem:[#allocation2 + $0x1a] sm:$0xff]
    %v1575 = vld [vmem:[#allocation2 + $0x13] sm:$0xff]
    %v1576 = vld [vmem:[#allocation2 + $0x1b] sm:$0xff]
    %v1578 = vsel %vm171, %v1575, 0
    %v1581 = vsel %vm171, %v1576, 0
    %1583 = vmatprep.subr.mxu0 0.0
    %1584 = vmatpush1.msra.mxu0 %v1284
    %1585 = vmatprep.subr.mxu0 0.0
    %1586 = vmatpush1.msra.mxu0 %v1285
    %1587 = vmatprep.subr.mxu0 0.0
    %1588 = vmatpush1.msra.mxu0 %v1286
    %1589 = vmatprep.subr.mxu0 0.0
    %1590 = vmatpush1.msra.mxu0 %v1287
    %1591 = vmatprep.subr.mxu0 0.0
    %1592 = vmatpush1.msra.mxu0 %v1288
    %1593 = vmatprep.subr.mxu0 0.0
    %1594 = vmatpush1.msra.mxu0 %v1289
    %1595 = vmatprep.subr.mxu0 0.0
    %1596 = vmatpush1.msra.mxu0 %v1290
    %1597 = vmatprep.subr.mxu0 0.0
    %1598 = vmatpush1.msra.mxu0 %v1291
    %1599 = vmatprep.subr.mxu0 0.0
    %1600 = vmatpush1.msra.mxu0 0.0
    %1601 = vmatprep.subr.mxu0 0.0
    %1602 = vmatpush1.msra.mxu0 0.0
    %1603 = vmatprep.subr.mxu0 0.0
    %1604 = vmatpush1.msra.mxu0 0.0
    %1605 = vmatprep.subr.mxu0 0.0
    %1606 = vmatpush1.msra.mxu0 0.0
    %1607 = vmatprep.subr.mxu0 0.0
    %1608 = vmatpush1.msra.mxu0 0.0
    %1609 = vmatprep.subr.mxu0 0.0
    %1610 = vmatpush1.msra.mxu0 0.0
    %1611 = vmatprep.subr.mxu0 0.0
    %1612 = vmatpush1.msra.mxu0 0.0
    %1613 = vmatprep.subr.mxu0 0.0
    %1614 = vmatpush1.msra.mxu0 0.0
    %1615 = vmatprep.subr.mxu0 0.0
    %1616 = vmatpush1.msra.mxu0 0.0
    %1617 = vmatprep.subr.mxu0 0.0
    %1618 = vmatpush1.msra.mxu0 0.0
    %1619 = vmatprep.subr.mxu0 0.0
    %1620 = vmatpush1.msra.mxu0 0.0
    %1621 = vmatprep.subr.mxu0 0.0
    %1622 = vmatpush1.msra.mxu0 0.0
    %1623 = vmatprep.subr.mxu0 0.0
    %1624 = vmatpush1.msra.mxu0 0.0
    %1625 = vmatprep.subr.mxu0 0.0
    %1626 = vmatpush1.msra.mxu0 0.0
    %1627 = vmatprep.subr.mxu0 0.0
    %1628 = vmatpush1.msra.mxu0 0.0
    %1629 = vmatprep.subr.mxu0 0.0
    %1630 = vmatpush1.msra.mxu0 0.0
    %1631 = vmatprep.subr.mxu0 0.0
    %1632 = vmatpush1.msra.mxu0 0.0
    %1633 = vmatprep.subr.mxu0 0.0
    %1634 = vmatpush1.msra.mxu0 0.0
    %1635 = vmatprep.subr.mxu0 0.0
    %1636 = vmatpush1.msra.mxu0 0.0
    %1637 = vmatprep.subr.mxu0 0.0
    %1638 = vmatpush1.msra.mxu0 0.0
    %1639 = vmatprep.subr.mxu0 0.0
    %1640 = vmatpush1.msra.mxu0 0.0
    %1641 = vmatprep.subr.mxu0 0.0
    %1642 = vmatpush1.msra.mxu0 0.0
    %1643 = vmatprep.subr.mxu0 0.0
    %1644 = vmatpush1.msra.mxu0 0.0
    %1645 = vmatprep.subr.mxu0 0.0
    %1646 = vmatpush1.msra.mxu0 0.0
    %1647 = vmatprep.mubr.f32.mxu0 0.0
    %1648 = vmatmul.mubr.f32.gmra.mrb[0].mxu0 %v1578
    %v1649 = vpop.f32.mrb[0].mxu0
    %v1650 = vadd.f32 0.0, %v1649
    %v1651 = vpop.f32.mrb[0].mxu0
    %1652 = vmatprep.mubr.f32.mxu0 0.0
    %1653 = vmatmul.mubr.f32.gmra.mrb[0].mxu0 %v1581
    %v1654 = vpop.f32.mrb[0].mxu0
    %v1655 = vadd.f32 0.0, %v1654
    %v1656 = vpop.f32.mrb[0].mxu0
    %1657 = vdwg.mxu0
    %v1659 = vsel %vm171, %v1573, 0
    %v1662 = vsel %vm171, %v1574, 0
    %1664 = vmatprep.subr.mxu0 0.0
    %1665 = vmatpush1.msra.mxu0 %v1276
    %1666 = vmatprep.subr.mxu0 0.0
    %1667 = vmatpush1.msra.mxu0 %v1277
    %1668 = vmatprep.subr.mxu0 0.0
    %1669 = vmatpush1.msra.mxu0 %v1278
    %1670 = vmatprep.subr.mxu0 0.0
    %1671 = vmatpush1.msra.mxu0 %v1279
    %1672 = vmatprep.subr.mxu0 0.0
    %1673 = vmatpush1.msra.mxu0 %v1280
    %1674 = vmatprep.subr.mxu0 0.0
    %1675 = vmatpush1.msra.mxu0 %v1281
    %1676 = vmatprep.subr.mxu0 0.0
    %1677 = vmatpush1.msra.mxu0 %v1282
    %1678 = vmatprep.subr.mxu0 0.0
    %1679 = vmatpush1.msra.mxu0 %v1283
    %1680 = vmatprep.subr.mxu0 0.0
    %1681 = vmatpush1.msra.mxu0 0.0
    %1682 = vmatprep.subr.mxu0 0.0
    %1683 = vmatpush1.msra.mxu0 0.0
    %1684 = vmatprep.subr.mxu0 0.0
    %1685 = vmatpush1.msra.mxu0 0.0
    %1686 = vmatprep.subr.mxu0 0.0
    %1687 = vmatpush1.msra.mxu0 0.0
    %1688 = vmatprep.subr.mxu0 0.0
    %1689 = vmatpush1.msra.mxu0 0.0
    %1690 = vmatprep.subr.mxu0 0.0
    %1691 = vmatpush1.msra.mxu0 0.0
    %1692 = vmatprep.subr.mxu0 0.0
    %1693 = vmatpush1.msra.mxu0 0.0
    %1694 = vmatprep.subr.mxu0 0.0
    %1695 = vmatpush1.msra.mxu0 0.0
    %1696 = vmatprep.subr.mxu0 0.0
    %1697 = vmatpush1.msra.mxu0 0.0
    %1698 = vmatprep.subr.mxu0 0.0
    %1699 = vmatpush1.msra.mxu0 0.0
    %1700 = vmatprep.subr.mxu0 0.0
    %1701 = vmatpush1.msra.mxu0 0.0
    %1702 = vmatprep.subr.mxu0 0.0
    %1703 = vmatpush1.msra.mxu0 0.0
    %1704 = vmatprep.subr.mxu0 0.0
    %1705 = vmatpush1.msra.mxu0 0.0
    %1706 = vmatprep.subr.mxu0 0.0
    %1707 = vmatpush1.msra.mxu0 0.0
    %1708 = vmatprep.subr.mxu0 0.0
    %1709 = vmatpush1.msra.mxu0 0.0
    %1710 = vmatprep.subr.mxu0 0.0
    %1711 = vmatpush1.msra.mxu0 0.0
    %1712 = vmatprep.subr.mxu0 0.0
    %1713 = vmatpush1.msra.mxu0 0.0
    %1714 = vmatprep.subr.mxu0 0.0
    %1715 = vmatpush1.msra.mxu0 0.0
    %1716 = vmatprep.subr.mxu0 0.0
    %1717 = vmatpush1.msra.mxu0 0.0
    %1718 = vmatprep.subr.mxu0 0.0
    %1719 = vmatpush1.msra.mxu0 0.0
    %1720 = vmatprep.subr.mxu0 0.0
    %1721 = vmatpush1.msra.mxu0 0.0
    %1722 = vmatprep.subr.mxu0 0.0
    %1723 = vmatpush1.msra.mxu0 0.0
    %1724 = vmatprep.subr.mxu0 0.0
    %1725 = vmatpush1.msra.mxu0 0.0
    %1726 = vmatprep.subr.mxu0 0.0
    %1727 = vmatpush1.msra.mxu0 0.0
    %1728 = vmatprep.mubr.f32.mxu0 0.0
    %1729 = vmatmul.mubr.f32.gmra.mrb[0].mxu0 %v1659
    %v1730 = vpop.f32.mrb[0].mxu0
    %v1731 = vadd.f32 %v1650, %v1730
    %v1732 = vpop.f32.mrb[0].mxu0
    %1733 = vmatprep.mubr.f32.mxu0 0.0
    %1734 = vmatmul.mubr.f32.gmra.mrb[0].mxu0 %v1662
    %v1735 = vpop.f32.mrb[0].mxu0
    %v1736 = vadd.f32 %v1655, %v1735
    %v1737 = vpop.f32.mrb[0].mxu0
    %1738 = vdwg.mxu0
    %v1739 = vld [vmem:[#allocation2 + $0x14] sm:$0xff]
    %v1740 = vld [vmem:[#allocation2 + $0x1c] sm:$0xff]
    %v1742 = vsel %vm171, %v1739, 0
    %v1745 = vsel %vm171, %v1740, 0
    %1747 = vmatprep.subr.mxu0 0.0
    %1748 = vmatpush1.msra.mxu0 %v1292
    %1749 = vmatprep.subr.mxu0 0.0
    %1750 = vmatpush1.msra.mxu0 %v1293
    %1751 = vmatprep.subr.mxu0 0.0
    %1752 = vmatpush1.msra.mxu0 %v1294
    %1753 = vmatprep.subr.mxu0 0.0
    %1754 = vmatpush1.msra.mxu0 %v1295
    %1755 = vmatprep.subr.mxu0 0.0
    %1756 = vmatpush1.msra.mxu0 %v1296
    %1757 = vmatprep.subr.mxu0 0.0
    %1758 = vmatpush1.msra.mxu0 %v1297
    %1759 = vmatprep.subr.mxu0 0.0
    %1760 = vmatpush1.msra.mxu0 %v1298
    %1761 = vmatprep.subr.mxu0 0.0
    %1762 = vmatpush1.msra.mxu0 %v1299
    %1763 = vmatprep.subr.mxu0 0.0
    %1764 = vmatpush1.msra.mxu0 0.0
    %1765 = vmatprep.subr.mxu0 0.0
    %1766 = vmatpush1.msra.mxu0 0.0
    %1767 = vmatprep.subr.mxu0 0.0
    %1768 = vmatpush1.msra.mxu0 0.0
    %1769 = vmatprep.subr.mxu0 0.0
    %1770 = vmatpush1.msra.mxu0 0.0
    %1771 = vmatprep.subr.mxu0 0.0
    %1772 = vmatpush1.msra.mxu0 0.0
    %1773 = vmatprep.subr.mxu0 0.0
    %1774 = vmatpush1.msra.mxu0 0.0
    %1775 = vmatprep.subr.mxu0 0.0
    %1776 = vmatpush1.msra.mxu0 0.0
    %1777 = vmatprep.subr.mxu0 0.0
    %1778 = vmatpush1.msra.mxu0 0.0
    %1779 = vmatprep.subr.mxu0 0.0
    %1780 = vmatpush1.msra.mxu0 0.0
    %1781 = vmatprep.subr.mxu0 0.0
    %1782 = vmatpush1.msra.mxu0 0.0
    %1783 = vmatprep.subr.mxu0 0.0
    %1784 = vmatpush1.msra.mxu0 0.0
    %1785 = vmatprep.subr.mxu0 0.0
    %1786 = vmatpush1.msra.mxu0 0.0
    %1787 = vmatprep.subr.mxu0 0.0
    %1788 = vmatpush1.msra.mxu0 0.0
    %1789 = vmatprep.subr.mxu0 0.0
    %1790 = vmatpush1.msra.mxu0 0.0
    %1791 = vmatprep.subr.mxu0 0.0
    %1792 = vmatpush1.msra.mxu0 0.0
    %1793 = vmatprep.subr.mxu0 0.0
    %1794 = vmatpush1.msra.mxu0 0.0
    %1795 = vmatprep.subr.mxu0 0.0
    %1796 = vmatpush1.msra.mxu0 0.0
    %1797 = vmatprep.subr.mxu0 0.0
    %1798 = vmatpush1.msra.mxu0 0.0
    %1799 = vmatprep.subr.mxu0 0.0
    %1800 = vmatpush1.msra.mxu0 0.0
    %1801 = vmatprep.subr.mxu0 0.0
    %1802 = vmatpush1.msra.mxu0 0.0
    %1803 = vmatprep.subr.mxu0 0.0
    %1804 = vmatpush1.msra.mxu0 0.0
    %1805 = vmatprep.subr.mxu0 0.0
    %1806 = vmatpush1.msra.mxu0 0.0
    %1807 = vmatprep.subr.mxu0 0.0
    %1808 = vmatpush1.msra.mxu0 0.0
    %1809 = vmatprep.subr.mxu0 0.0
    %1810 = vmatpush1.msra.mxu0 0.0
    %1811 = vmatprep.mubr.f32.mxu0 0.0
    %1812 = vmatmul.mubr.f32.gmra.mrb[0].mxu0 %v1742
    %v1813 = vpop.f32.mrb[0].mxu0
    %v1814 = vadd.f32 0.0, %v1813
    %v1815 = vpop.f32.mrb[0].mxu0
    %1816 = vmatprep.mubr.f32.mxu0 0.0
    %1817 = vmatmul.mubr.f32.gmra.mrb[0].mxu0 %v1745
    %v1818 = vpop.f32.mrb[0].mxu0
    %v1819 = vadd.f32 0.0, %v1818
    %v1820 = vpop.f32.mrb[0].mxu0
    %1821 = vdwg.mxu0
    %v1822 = vadd.f32 %v1731, %v1814
    %v1823 = vadd.f32 %v1736, %v1819
    %v1824 = vld [vmem:[%s13] sm:$0x1]
    %v1826 = vlaneseq
    %v1827 = vshrl.u32 %v1826, 7
    %v1828 = vsub.s32 0, %v1827
    %v1829 = vrot.slane %v1824, %v1828
    %v1831 = vadd.f32 %v1822, %v1829
    %v1832 = vadd.f32 %v1823, %v1829
    %v1833 = vadd.f32 %v1831, %v159
    %v1834 = vadd.f32 %v1832, %v160
    %1835 = vst.msk [vmem:[#allocation18 + $0x10] sm:$0xff] %vm171, %v1833
    %1836 = vst.msk [vmem:[#allocation18 + $0x18] sm:$0xff] %vm171, %v1834
    // Predicated region
    $region90: #{tpu_custom_call.1} parent=1 // pred_check
      _
    $region91: #{tpu_custom_call.1} parent=1 // pred_check_branch
      %1838 = sbr.rel (0) target = $region93
    $region92: #{tpu_custom_call.1} parent=1 // pred_region
      %s1840 = ssub.s32 512, 512
      %1841 = vsyncadd [#allocation6], %s1840
      %s1842 = sshll.u32 [#allocation18], 4
      %s1843 = int_to_ptr.vmem [resolvable:$true] %s1842
      %1848 = dma.vmem_to_hbm [thread:$0]  %s1843, 512, %s14, [#allocation6], 128, 128, 8
    $region93: #{tpu_custom_call.1} parent=1 // pred_fallthru
      _
    // Predicated region
    $region94: #{tpu_custom_call.1} parent=1 // pred_check
      _
    $region95: #{tpu_custom_call.1} parent=1 // pred_check_branch
      %1850 = sbr.rel (0) target = $region97
    $region96: #{tpu_custom_call.1} parent=1 // pred_region
      %1851 = dma.done [#allocation6], 512
    $region97: #{tpu_custom_call.1} parent=1 // pred_fallthru
      _
    %1852 = vsyncpa [#allocation5], 1
    %1853 = vsyncpa [#allocation8], 1
    %1854 = vsyncpa [#allocation11], 1
    %1855 = vsyncpa [#allocation14], 1
    %1856 = vsyncpa [#allocation17], 1
    %1857 = vsyncpa [#allocation6], 1

</llo_original>
